<compile_context>
chip_gen: v7x
topology: tpu7x:2x2x1
jax: 0.10.0
libtpu: 0.0.40
codegen_flags: <defaults>
</compile_context>

<pallas_src>
import numpy as np
import jax
import jax.numpy as jnp
from jax.experimental import pallas as pl
from jax.experimental.pallas import tpu as pltpu

# ---------------------------------------------------------------------------
# static model config
# ---------------------------------------------------------------------------
N_DEF = 2
H1, W1, C_IN, C1 = 16, 16, 4, 8        # conv1: 16x16x4 -> 16x16x8
H2, W2, C2 = 8, 8, 16                  # conv2:  8x8x8  ->  8x8x16
HF, WF = 4, 4                          # spatial after second pool
F_IN = C2 * HF * WF                    # 256 (torch.flatten, CHW order)
F_HID, F_OUT = 32, 10
LANES = 128

# packed-parameter slab row offsets (all static Python ints)
R_T1 = 0
N_T1 = 3 * C_IN * W1                   # 192   conv1 Toeplitz  (3, 64, 128)
R_T2 = R_T1 + N_T1                     # 192
N_T2 = 3 * LANES                       # 384   conv2 Toeplitz  (3, 128, 128)
R_P1 = R_T2 + N_T2                     # 576   pool1 placement (128, 128)
R_W1F = R_P1 + LANES                   # 704   folded fc1      (4, 128, 128)
R_FC2 = R_W1F + HF * LANES             # 1216  fc2 (padded)    (128, 128)
R_B1 = R_FC2 + LANES                   # 1344  conv1 bias      (1, 128)
R_B2 = R_B1 + 1                        # 1345  conv2 bias      (1, 128)
R_FB1 = R_B2 + 1                       # 1346  fc1 bias        (1, 128)
R_FB2 = R_FB1 + 1                      # 1347  fc2 bias        (1, 128)
PARAM_ROWS = R_FB2 + 1                 # 1348


# ---------------------------------------------------------------------------
# in-kernel helper
# ---------------------------------------------------------------------------
def _roll_left_lanes(x, k):
    """out[:, i] = x[:, (i + k) % L].  Explicit lane roll (two lane slices +
    concat) so the shift direction is unambiguous; the wrapped tail lands on
    odd-w lanes that are zero-weighted downstream, so it never matters."""
    return jnp.concatenate([x[:, k:], x[:, :k]], axis=-1)


# ---------------------------------------------------------------------------
# fused forward kernel: conv1 + pool1 + conv2 + pool2 + fc1 + fc2
# ---------------------------------------------------------------------------
def _vgg_fused_kernel(x_ref, prm_ref, o_ref, xp1_ref, xp2_ref):
    f32 = jnp.float32
    n = x_ref.shape[0]

    def prm(row, nrows):
        # static-offset slice of the packed parameter slab (loads a value)
        return prm_ref[row:row + nrows, :]

    # ---- stage 0: ingest the NCHW input into the h-padded, lane-dense conv1
    #      slab.  xp1[b, 1+h, c*W1 + w] = x[b, c, h, w]; rows 0 / H1+1 are the
    #      zero halo (w-padding is implicit in the Toeplitz weights).
    xp1_ref[:, 0:1, :] = jnp.zeros((n, 1, C_IN * W1), f32)
    xp1_ref[:, H1 + 1:H1 + 2, :] = jnp.zeros((n, 1, C_IN * W1), f32)
    for c in range(C_IN):
        xp1_ref[:, 1:H1 + 1, c * W1:(c + 1) * W1] = x_ref[:, c, :, :]

    # ---- conv1 + ReLU: 3 block-Toeplitz row matmuls (one per kh tap).
    #      rows = (b, h);  output lanes = w*C1 + cout  (128 dense lanes).
    acc1 = (
        jnp.dot(xp1_ref[:, 0:H1, :].reshape(n * H1, C_IN * W1),
                prm(R_T1, C_IN * W1), preferred_element_type=f32)
        + jnp.dot(xp1_ref[:, 1:H1 + 1, :].reshape(n * H1, C_IN * W1),
                  prm(R_T1 + C_IN * W1, C_IN * W1), preferred_element_type=f32)
        + jnp.dot(xp1_ref[:, 2:H1 + 2, :].reshape(n * H1, C_IN * W1),
                  prm(R_T1 + 2 * C_IN * W1, C_IN * W1), preferred_element_type=f32))
    a1 = jnp.maximum(acc1 + prm(R_B1, 1), 0.0)                       # (n*H1, 128)

    # ---- maxpool1 2x2: sublane pair-max + lane pair-max; then ONE placement
    #      matmul that selects the even-w lanes AND lays them out (with zero
    #      left/right padding lanes) exactly as conv2's input slab wants.
    a1p = a1.reshape(n, H2, 2, W1 * C1)
    h1 = jnp.maximum(a1p[:, :, 0, :], a1p[:, :, 1, :]).reshape(n * H2, W1 * C1)
    pm1 = jnp.maximum(h1, _roll_left_lanes(h1, C1))                  # valid at even w
    xi = jnp.dot(pm1, prm(R_P1, LANES), preferred_element_type=f32)  # (n*H2, 128)
    xp2_ref[:, 1:H2 + 1, :] = xi.reshape(n, H2, LANES)
    xp2_ref[:, 0:1, :] = jnp.zeros((n, 1, LANES), f32)
    xp2_ref[:, H2 + 1:H2 + 2, :] = jnp.zeros((n, 1, LANES), f32)

    # ---- conv2 + ReLU: same 3-tap block-Toeplitz structure (K padded to 128;
    #      the pad lanes of xp2 are zero and the pad rows of T2 are zero).
    acc2 = (
        jnp.dot(xp2_ref[:, 0:H2, :].reshape(n * H2, LANES),
                prm(R_T2, LANES), preferred_element_type=f32)
        + jnp.dot(xp2_ref[:, 1:H2 + 1, :].reshape(n * H2, LANES),
                  prm(R_T2 + LANES, LANES), preferred_element_type=f32)
        + jnp.dot(xp2_ref[:, 2:H2 + 2, :].reshape(n * H2, LANES),
                  prm(R_T2 + 2 * LANES, LANES), preferred_element_type=f32))
    a2 = jnp.maximum(acc2 + prm(R_B2, 1), 0.0)                       # (n*H2, 128)

    # ---- maxpool2 + flatten + fc1, fused: the even-w selection and torch's
    #      CHW flatten order are folded into the pre-permuted fc1 weights, so
    #      the pooled features never leave vregs (no flat_ref scratch).
    a2p = a2.reshape(n, HF, 2, W2 * C2)
    h2 = jnp.maximum(a2p[:, :, 0, :], a2p[:, :, 1, :]).reshape(n * HF, W2 * C2)
    pm2 = jnp.maximum(h2, _roll_left_lanes(h2, C2)).reshape(n, HF, W2 * C2)
    hpre = prm(R_FB1, 1)                                             # (1, 128) bias
    for h in range(HF):
        hpre = hpre + jnp.dot(pm2[:, h, :], prm(R_W1F + h * LANES, LANES),
                              preferred_element_type=f32)
    hid = jnp.maximum(hpre, 0.0)                                     # (n, 128); lanes>=32 are 0

    # ---- fc2 (natural 10-wide output; a single tiny masked store).
    out = jnp.dot(hid, prm(R_FC2, LANES), preferred_element_type=f32) + prm(R_FB2, 1)
    o_ref[...] = out[:, :F_OUT]


# ---------------------------------------------------------------------------
# wrapper: single pallas_call, whole problem in one VMEM-resident block
# ---------------------------------------------------------------------------
def vgg_feats_forward(x_nchw, packed_params):
    """Fused forward.  x_nchw: (N, 4, 16, 16) f32 (PyTorch-native layout)."""
    n = x_nchw.shape[0]
    return pl.pallas_call(
        _vgg_fused_kernel,
        out_shape=jax.ShapeDtypeStruct((n, F_OUT), jnp.float32),
        scratch_shapes=[
            pltpu.VMEM((n, H1 + 2, C_IN * W1), jnp.float32),   # conv1 padded slab
            pltpu.VMEM((n, H2 + 2, LANES), jnp.float32),       # conv2 padded slab
        ],
    )(x_nchw, packed_params)


# ---------------------------------------------------------------------------
# parameters: PyTorch-native layouts, packed once into a single f32 slab
# ---------------------------------------------------------------------------
def init_params(key):
    """Parameters in PyTorch-native layouts (conv OIHW, linear (out, in))."""
    ks = jax.random.split(key, 8)
    s = 0.1
    return {
        "conv1_w": s * jax.random.normal(ks[0], (C1, C_IN, 3, 3), jnp.float32),
        "conv1_b": s * jax.random.normal(ks[1], (C1,), jnp.float32),
        "conv2_w": s * jax.random.normal(ks[2], (C2, C1, 3, 3), jnp.float32),
        "conv2_b": s * jax.random.normal(ks[3], (C2,), jnp.float32),
        "fc1_w": s * jax.random.normal(ks[4], (F_HID, F_IN), jnp.float32),
        "fc1_b": s * jax.random.normal(ks[5], (F_HID,), jnp.float32),
        "fc2_w": s * jax.random.normal(ks[6], (F_OUT, F_HID), jnp.float32),
        "fc2_b": s * jax.random.normal(ks[7], (F_OUT,), jnp.float32),
    }


def _toeplitz(conv_w, width, n_rows):
    """Block-Toeplitz weight for a pad=1 3x3 conv executed as 3 row matmuls.

    conv_w : (Cout, Cin, 3, 3) PyTorch OIHW weight.
    rows   : input-slab lane   = cin*width + w_in   (c-major).
    cols   : output-row lane   = w_out*Cout + cout  (w-major).
    Width padding is implicit: out-of-range w_in taps are simply omitted.
    """
    cout_n, cin_n = conv_w.shape[0], conv_w.shape[1]
    t = np.zeros((3, n_rows, width * cout_n), np.float32)
    for kh in range(3):
        for kw in range(3):
            for wo in range(width):
                wi = wo + kw - 1
                if 0 <= wi < width:
                    for ci in range(cin_n):
                        t[kh, ci * width + wi, wo * cout_n:(wo + 1) * cout_n] = \
                            conv_w[:, ci, kh, kw]
    return t


def prepare_params(p):
    """One-time host-side conversion into ONE packed (PARAM_ROWS, 128) f32 slab."""
    conv1_w = np.asarray(p["conv1_w"], np.float32)
    conv1_b = np.asarray(p["conv1_b"], np.float32)
    conv2_w = np.asarray(p["conv2_w"], np.float32)
    conv2_b = np.asarray(p["conv2_b"], np.float32)
    fc1_w = np.asarray(p["fc1_w"], np.float32)
    fc1_b = np.asarray(p["fc1_b"], np.float32)
    fc2_w = np.asarray(p["fc2_w"], np.float32)
    fc2_b = np.asarray(p["fc2_b"], np.float32)

    t1 = _toeplitz(conv1_w, W1, C_IN * W1)     # (3, 64, 128)
    t2 = _toeplitz(conv2_w, W2, LANES)         # (3, 128, 128); rows >= 64 stay zero

    # pool1 placement: conv1-out lane (2*w'*C1 + c) -> conv2-slab lane (c*W2 + w')
    p1 = np.zeros((W1 * C1, LANES), np.float32)
    for wp in range(W2):
        for c in range(C1):
            p1[(2 * wp) * C1 + c, c * W2 + wp] = 1.0

    # fc1 folded with pool2's even-w selection and torch's CHW flatten order:
    # conv2-out lane (2*w'*C2 + c) of pooled row h -> fc1 input index c*16 + h*4 + w'
    w1f = np.zeros((HF, LANES, LANES), np.float32)
    for h in range(HF):
        for wp in range(WF):
            for c in range(C2):
                w1f[h, (2 * wp) * C2 + c, :F_HID] = fc1_w[:, c * (HF * WF) + h * WF + wp]

    fc2 = np.zeros((LANES, LANES), np.float32)
    fc2[:F_HID, :F_OUT] = fc2_w.T

    b1 = np.tile(conv1_b, W1)[None, :].astype(np.float32)       # lane w*C1+c -> b[c]
    b2 = np.tile(conv2_b, W2)[None, :].astype(np.float32)       # lane w*C2+c -> b[c]
    fb1 = np.zeros((1, LANES), np.float32); fb1[0, :F_HID] = fc1_b
    fb2 = np.zeros((1, LANES), np.float32); fb2[0, :F_OUT] = fc2_b

    slab = np.concatenate([
        t1.reshape(N_T1, LANES),
        t2.reshape(N_T2, LANES),
        p1,
        w1f.reshape(HF * LANES, LANES),
        fc2,
        b1, b2, fb1, fb2,
    ], axis=0)
    assert slab.shape == (PARAM_ROWS, LANES)
    return jnp.asarray(slab)


if __name__ == "__main__":
    key = jax.random.PRNGKey(0)
    k_x, k_p = jax.random.split(key)
    x = jax.random.normal(k_x, (N_DEF, C_IN, H1, W1), jnp.float32)   # NCHW, like PyTorch
    params = prepare_params(init_params(k_p))

    fwd = jax.jit(vgg_feats_forward)
    out = jax.block_until_ready(fwd(x, params))
    assert out.shape == (N_DEF, F_OUT) and out.dtype == jnp.float32
    print("KERNEL_OK")
</pallas_src>

<mosaic_0001>
module attributes {stable_mosaic.version = 11 : i64} {
  func.func @_vgg_fused_kernel(%arg0: memref<2x4x16x16xf32, #tpu.memory_space<vmem>>, %arg1: memref<1348x128xf32, #tpu.memory_space<vmem>>, %arg2: memref<2x10xf32, #tpu.memory_space<vmem>>, %arg3: memref<2x18x64xf32, #tpu.memory_space<vmem>>, %arg4: memref<2x10x128xf32, #tpu.memory_space<vmem>>) attributes {dimension_semantics = [], scalar_prefetch = 0 : i64, scratch_operands = 2 : i64, tpu.core_type = #tpu.core_type<tc>} {
    %cst = arith.constant 0.000000e+00 : f32
    %0 = vector.broadcast %cst : f32 to vector<2x1x64xf32>
    %c0 = arith.constant 0 : index
    %c0_0 = arith.constant 0 : index
    %c0_1 = arith.constant 0 : index
    %1 = vector.load %arg3[%c0, %c0_0, %c0_1] : memref<2x18x64xf32, #tpu.memory_space<vmem>>, vector<2x1x64xf32>
    tpu.vector_store %arg3[%c0, %c0_0, %c0_1], %0 {strides = array<i32>} : memref<2x18x64xf32, #tpu.memory_space<vmem>>, vector<2x1x64xf32>,
    %cst_2 = arith.constant 0.000000e+00 : f32
    %2 = vector.broadcast %cst_2 : f32 to vector<2x1x64xf32>
    %c0_3 = arith.constant 0 : index
    %c17 = arith.constant 17 : index
    %c0_4 = arith.constant 0 : index
    %3 = vector.load %arg3[%c0_3, %c17, %c0_4] : memref<2x18x64xf32, #tpu.memory_space<vmem>>, vector<2x1x64xf32>
    tpu.vector_store %arg3[%c0_3, %c17, %c0_4], %2 {strides = array<i32>} : memref<2x18x64xf32, #tpu.memory_space<vmem>>, vector<2x1x64xf32>,
    %c0_5 = arith.constant 0 : index
    %c0_6 = arith.constant 0 : index
    %c0_7 = arith.constant 0 : index
    %c0_8 = arith.constant 0 : index
    %4 = vector.load %arg0[%c0_5, %c0_6, %c0_7, %c0_8] : memref<2x4x16x16xf32, #tpu.memory_space<vmem>>, vector<2x1x16x16xf32>
    %5 = vector.shape_cast %4 : vector<2x1x16x16xf32> to vector<2x16x16xf32>
    %c0_9 = arith.constant 0 : index
    %c1 = arith.constant 1 : index
    %c0_10 = arith.constant 0 : index
    %6 = vector.load %arg3[%c0_9, %c1, %c0_10] : memref<2x18x64xf32, #tpu.memory_space<vmem>>, vector<2x16x16xf32>
    tpu.vector_store %arg3[%c0_9, %c1, %c0_10], %5 {strides = array<i32>} : memref<2x18x64xf32, #tpu.memory_space<vmem>>, vector<2x16x16xf32>,
    %c0_11 = arith.constant 0 : index
    %c1_12 = arith.constant 1 : index
    %c0_13 = arith.constant 0 : index
    %c0_14 = arith.constant 0 : index
    %7 = vector.load %arg0[%c0_11, %c1_12, %c0_13, %c0_14] : memref<2x4x16x16xf32, #tpu.memory_space<vmem>>, vector<2x1x16x16xf32>
    %8 = vector.shape_cast %7 : vector<2x1x16x16xf32> to vector<2x16x16xf32>
    %c0_15 = arith.constant 0 : index
    %c1_16 = arith.constant 1 : index
    %c16 = arith.constant 16 : index
    %9 = vector.load %arg3[%c0_15, %c1_16, %c16] : memref<2x18x64xf32, #tpu.memory_space<vmem>>, vector<2x16x16xf32>
    tpu.vector_store %arg3[%c0_15, %c1_16, %c16], %8 {strides = array<i32>} : memref<2x18x64xf32, #tpu.memory_space<vmem>>, vector<2x16x16xf32>,
    %c0_17 = arith.constant 0 : index
    %c2 = arith.constant 2 : index
    %c0_18 = arith.constant 0 : index
    %c0_19 = arith.constant 0 : index
    %10 = vector.load %arg0[%c0_17, %c2, %c0_18, %c0_19] : memref<2x4x16x16xf32, #tpu.memory_space<vmem>>, vector<2x1x16x16xf32>
    %11 = vector.shape_cast %10 : vector<2x1x16x16xf32> to vector<2x16x16xf32>
    %c0_20 = arith.constant 0 : index
    %c1_21 = arith.constant 1 : index
    %c32 = arith.constant 32 : index
    %12 = vector.load %arg3[%c0_20, %c1_21, %c32] : memref<2x18x64xf32, #tpu.memory_space<vmem>>, vector<2x16x16xf32>
    tpu.vector_store %arg3[%c0_20, %c1_21, %c32], %11 {strides = array<i32>} : memref<2x18x64xf32, #tpu.memory_space<vmem>>, vector<2x16x16xf32>,
    %c0_22 = arith.constant 0 : index
    %c3 = arith.constant 3 : index
    %c0_23 = arith.constant 0 : index
    %c0_24 = arith.constant 0 : index
    %13 = vector.load %arg0[%c0_22, %c3, %c0_23, %c0_24] : memref<2x4x16x16xf32, #tpu.memory_space<vmem>>, vector<2x1x16x16xf32>
    %14 = vector.shape_cast %13 : vector<2x1x16x16xf32> to vector<2x16x16xf32>
    %c0_25 = arith.constant 0 : index
    %c1_26 = arith.constant 1 : index
    %c48 = arith.constant 48 : index
    %15 = vector.load %arg3[%c0_25, %c1_26, %c48] : memref<2x18x64xf32, #tpu.memory_space<vmem>>, vector<2x16x16xf32>
    tpu.vector_store %arg3[%c0_25, %c1_26, %c48], %14 {strides = array<i32>} : memref<2x18x64xf32, #tpu.memory_space<vmem>>, vector<2x16x16xf32>,
    %c0_27 = arith.constant 0 : index
    %c0_28 = arith.constant 0 : index
    %c0_29 = arith.constant 0 : index
    %16 = vector.load %arg3[%c0_27, %c0_28, %c0_29] : memref<2x18x64xf32, #tpu.memory_space<vmem>>, vector<2x16x64xf32>
    %17 = vector.shape_cast %16 : vector<2x16x64xf32> to vector<32x64xf32>
    %c0_30 = arith.constant 0 : index
    %c0_31 = arith.constant 0 : index
    %18 = vector.load %arg1[%c0_30, %c0_31] : memref<1348x128xf32, #tpu.memory_space<vmem>>, vector<64x128xf32>
    %cst_32 = arith.constant dense<0.000000e+00> : vector<32x128xf32>
    %19 = tpu.matmul %17, %18, %cst_32 {dimension_numbers = #tpu.dot_dimension_numbers<[1], [0], [0], [1], [0, 0, 1, 1], [], []>} : vector<32x64xf32>, vector<64x128xf32>, vector<32x128xf32> -> vector<32x128xf32>
    %c0_33 = arith.constant 0 : index
    %c1_34 = arith.constant 1 : index
    %c0_35 = arith.constant 0 : index
    %20 = vector.load %arg3[%c0_33, %c1_34, %c0_35] : memref<2x18x64xf32, #tpu.memory_space<vmem>>, vector<2x16x64xf32>
    %21 = vector.shape_cast %20 : vector<2x16x64xf32> to vector<32x64xf32>
    %c64 = arith.constant 64 : index
    %c0_36 = arith.constant 0 : index
    %22 = vector.load %arg1[%c64, %c0_36] : memref<1348x128xf32, #tpu.memory_space<vmem>>, vector<64x128xf32>
    %cst_37 = arith.constant dense<0.000000e+00> : vector<32x128xf32>
    %23 = tpu.matmul %21, %22, %cst_37 {dimension_numbers = #tpu.dot_dimension_numbers<[1], [0], [0], [1], [0, 0, 1, 1], [], []>} : vector<32x64xf32>, vector<64x128xf32>, vector<32x128xf32> -> vector<32x128xf32>
    %24 = arith.addf %19, %23 : vector<32x128xf32>
    %c0_38 = arith.constant 0 : index
    %c2_39 = arith.constant 2 : index
    %c0_40 = arith.constant 0 : index
    %25 = vector.load %arg3[%c0_38, %c2_39, %c0_40] : memref<2x18x64xf32, #tpu.memory_space<vmem>>, vector<2x16x64xf32>
    %26 = vector.shape_cast %25 : vector<2x16x64xf32> to vector<32x64xf32>
    %c128 = arith.constant 128 : index
    %c0_41 = arith.constant 0 : index
    %27 = vector.load %arg1[%c128, %c0_41] : memref<1348x128xf32, #tpu.memory_space<vmem>>, vector<64x128xf32>
    %cst_42 = arith.constant dense<0.000000e+00> : vector<32x128xf32>
    %28 = tpu.matmul %26, %27, %cst_42 {dimension_numbers = #tpu.dot_dimension_numbers<[1], [0], [0], [1], [0, 0, 1, 1], [], []>} : vector<32x64xf32>, vector<64x128xf32>, vector<32x128xf32> -> vector<32x128xf32>
    %29 = arith.addf %24, %28 : vector<32x128xf32>
    %c1344 = arith.constant 1344 : index
    %c0_43 = arith.constant 0 : index
    %30 = vector.load %arg1[%c1344, %c0_43] : memref<1348x128xf32, #tpu.memory_space<vmem>>, vector<1x128xf32>
    %31 = vector.broadcast %30 : vector<1x128xf32> to vector<32x128xf32>
    %32 = arith.addf %29, %31 : vector<32x128xf32>
    %cst_44 = arith.constant 0.000000e+00 : f32
    %33 = vector.broadcast %cst_44 : f32 to vector<32x128xf32>
    %34 = arith.maximumf %32, %33 : vector<32x128xf32>
    %35 = vector.shape_cast %34 : vector<32x128xf32> to vector<2x8x2x128xf32>
    %36 = vector.extract_strided_slice %35 {offsets = [0, 0, 0, 0], sizes = [2, 8, 1, 128], strides = [1, 1, 1, 1]} : vector<2x8x2x128xf32> to vector<2x8x1x128xf32>
    %37 = vector.shape_cast %36 : vector<2x8x1x128xf32> to vector<2x8x128xf32>
    %38 = vector.extract_strided_slice %35 {offsets = [0, 0, 1, 0], sizes = [2, 8, 1, 128], strides = [1, 1, 1, 1]} : vector<2x8x2x128xf32> to vector<2x8x1x128xf32>
    %39 = vector.shape_cast %38 : vector<2x8x1x128xf32> to vector<2x8x128xf32>
    %40 = arith.maximumf %37, %39 : vector<2x8x128xf32>
    %41 = vector.shape_cast %40 : vector<2x8x128xf32> to vector<16x128xf32>
    %42 = vector.extract_strided_slice %41 {offsets = [0, 8], sizes = [16, 120], strides = [1, 1]} : vector<16x128xf32> to vector<16x120xf32>
    %43 = vector.extract_strided_slice %41 {offsets = [0, 0], sizes = [16, 8], strides = [1, 1]} : vector<16x128xf32> to vector<16x8xf32>
    %44 = tpu.concatenate %42, %43 in 1 : vector<16x120xf32>, vector<16x8xf32> -> vector<16x128xf32>
    %45 = arith.maximumf %41, %44 : vector<16x128xf32>
    %c576 = arith.constant 576 : index
    %c0_45 = arith.constant 0 : index
    %46 = vector.load %arg1[%c576, %c0_45] : memref<1348x128xf32, #tpu.memory_space<vmem>>, vector<128x128xf32>
    %cst_46 = arith.constant dense<0.000000e+00> : vector<16x128xf32>
    %47 = tpu.matmul %45, %46, %cst_46 {dimension_numbers = #tpu.dot_dimension_numbers<[1], [0], [0], [1], [0, 0, 1, 1], [], []>} : vector<16x128xf32>, vector<128x128xf32>, vector<16x128xf32> -> vector<16x128xf32>
    %48 = vector.shape_cast %47 : vector<16x128xf32> to vector<2x8x128xf32>
    %c0_47 = arith.constant 0 : index
    %c1_48 = arith.constant 1 : index
    %c0_49 = arith.constant 0 : index
    %49 = vector.load %arg4[%c0_47, %c1_48, %c0_49] : memref<2x10x128xf32, #tpu.memory_space<vmem>>, vector<2x8x128xf32>
    tpu.vector_store %arg4[%c0_47, %c1_48, %c0_49], %48 {strides = array<i32>} : memref<2x10x128xf32, #tpu.memory_space<vmem>>, vector<2x8x128xf32>,
    %cst_50 = arith.constant 0.000000e+00 : f32
    %50 = vector.broadcast %cst_50 : f32 to vector<2x1x128xf32>
    %c0_51 = arith.constant 0 : index
    %c0_52 = arith.constant 0 : index
    %c0_53 = arith.constant 0 : index
    %51 = vector.load %arg4[%c0_51, %c0_52, %c0_53] : memref<2x10x128xf32, #tpu.memory_space<vmem>>, vector<2x1x128xf32>
    tpu.vector_store %arg4[%c0_51, %c0_52, %c0_53], %50 {strides = array<i32>} : memref<2x10x128xf32, #tpu.memory_space<vmem>>, vector<2x1x128xf32>,
    %cst_54 = arith.constant 0.000000e+00 : f32
    %52 = vector.broadcast %cst_54 : f32 to vector<2x1x128xf32>
    %c0_55 = arith.constant 0 : index
    %c9 = arith.constant 9 : index
    %c0_56 = arith.constant 0 : index
    %53 = vector.load %arg4[%c0_55, %c9, %c0_56] : memref<2x10x128xf32, #tpu.memory_space<vmem>>, vector<2x1x128xf32>
    tpu.vector_store %arg4[%c0_55, %c9, %c0_56], %52 {strides = array<i32>} : memref<2x10x128xf32, #tpu.memory_space<vmem>>, vector<2x1x128xf32>,
    %c0_57 = arith.constant 0 : index
    %c0_58 = arith.constant 0 : index
    %c0_59 = arith.constant 0 : index
    %54 = vector.load %arg4[%c0_57, %c0_58, %c0_59] : memref<2x10x128xf32, #tpu.memory_space<vmem>>, vector<2x8x128xf32>
    %55 = vector.shape_cast %54 : vector<2x8x128xf32> to vector<16x128xf32>
    %c192 = arith.constant 192 : index
    %c0_60 = arith.constant 0 : index
    %56 = vector.load %arg1[%c192, %c0_60] : memref<1348x128xf32, #tpu.memory_space<vmem>>, vector<128x128xf32>
    %cst_61 = arith.constant dense<0.000000e+00> : vector<16x128xf32>
    %57 = tpu.matmul %55, %56, %cst_61 {dimension_numbers = #tpu.dot_dimension_numbers<[1], [0], [0], [1], [0, 0, 1, 1], [], []>} : vector<16x128xf32>, vector<128x128xf32>, vector<16x128xf32> -> vector<16x128xf32>
    %c0_62 = arith.constant 0 : index
    %c1_63 = arith.constant 1 : index
    %c0_64 = arith.constant 0 : index
    %58 = vector.load %arg4[%c0_62, %c1_63, %c0_64] : memref<2x10x128xf32, #tpu.memory_space<vmem>>, vector<2x8x128xf32>
    %59 = vector.shape_cast %58 : vector<2x8x128xf32> to vector<16x128xf32>
    %c320 = arith.constant 320 : index
    %c0_65 = arith.constant 0 : index
    %60 = vector.load %arg1[%c320, %c0_65] : memref<1348x128xf32, #tpu.memory_space<vmem>>, vector<128x128xf32>
    %cst_66 = arith.constant dense<0.000000e+00> : vector<16x128xf32>
    %61 = tpu.matmul %59, %60, %cst_66 {dimension_numbers = #tpu.dot_dimension_numbers<[1], [0], [0], [1], [0, 0, 1, 1], [], []>} : vector<16x128xf32>, vector<128x128xf32>, vector<16x128xf32> -> vector<16x128xf32>
    %62 = arith.addf %57, %61 : vector<16x128xf32>
    %c0_67 = arith.constant 0 : index
    %c2_68 = arith.constant 2 : index
    %c0_69 = arith.constant 0 : index
    %63 = vector.load %arg4[%c0_67, %c2_68, %c0_69] : memref<2x10x128xf32, #tpu.memory_space<vmem>>, vector<2x8x128xf32>
    %64 = vector.shape_cast %63 : vector<2x8x128xf32> to vector<16x128xf32>
    %c448 = arith.constant 448 : index
    %c0_70 = arith.constant 0 : index
    %65 = vector.load %arg1[%c448, %c0_70] : memref<1348x128xf32, #tpu.memory_space<vmem>>, vector<128x128xf32>
    %cst_71 = arith.constant dense<0.000000e+00> : vector<16x128xf32>
    %66 = tpu.matmul %64, %65, %cst_71 {dimension_numbers = #tpu.dot_dimension_numbers<[1], [0], [0], [1], [0, 0, 1, 1], [], []>} : vector<16x128xf32>, vector<128x128xf32>, vector<16x128xf32> -> vector<16x128xf32>
    %67 = arith.addf %62, %66 : vector<16x128xf32>
    %c1345 = arith.constant 1345 : index
    %c0_72 = arith.constant 0 : index
    %68 = vector.load %arg1[%c1345, %c0_72] : memref<1348x128xf32, #tpu.memory_space<vmem>>, vector<1x128xf32>
    %69 = vector.broadcast %68 : vector<1x128xf32> to vector<16x128xf32>
    %70 = arith.addf %67, %69 : vector<16x128xf32>
    %cst_73 = arith.constant 0.000000e+00 : f32
    %71 = vector.broadcast %cst_73 : f32 to vector<16x128xf32>
    %72 = arith.maximumf %70, %71 : vector<16x128xf32>
    %73 = vector.shape_cast %72 : vector<16x128xf32> to vector<2x4x2x128xf32>
    %74 = vector.extract_strided_slice %73 {offsets = [0, 0, 0, 0], sizes = [2, 4, 1, 128], strides = [1, 1, 1, 1]} : vector<2x4x2x128xf32> to vector<2x4x1x128xf32>
    %75 = vector.shape_cast %74 : vector<2x4x1x128xf32> to vector<2x4x128xf32>
    %76 = vector.extract_strided_slice %73 {offsets = [0, 0, 1, 0], sizes = [2, 4, 1, 128], strides = [1, 1, 1, 1]} : vector<2x4x2x128xf32> to vector<2x4x1x128xf32>
    %77 = vector.shape_cast %76 : vector<2x4x1x128xf32> to vector<2x4x128xf32>
    %78 = arith.maximumf %75, %77 : vector<2x4x128xf32>
    %79 = vector.shape_cast %78 : vector<2x4x128xf32> to vector<8x128xf32>
    %80 = vector.extract_strided_slice %79 {offsets = [0, 16], sizes = [8, 112], strides = [1, 1]} : vector<8x128xf32> to vector<8x112xf32>
    %81 = vector.extract_strided_slice %79 {offsets = [0, 0], sizes = [8, 16], strides = [1, 1]} : vector<8x128xf32> to vector<8x16xf32>
    %82 = tpu.concatenate %80, %81 in 1 : vector<8x112xf32>, vector<8x16xf32> -> vector<8x128xf32>
    %83 = arith.maximumf %79, %82 : vector<8x128xf32>
    %84 = vector.shape_cast %83 : vector<8x128xf32> to vector<2x4x128xf32>
    %c1346 = arith.constant 1346 : index
    %c0_74 = arith.constant 0 : index
    %85 = vector.load %arg1[%c1346, %c0_74] : memref<1348x128xf32, #tpu.memory_space<vmem>>, vector<1x128xf32>
    %86 = vector.extract_strided_slice %84 {offsets = [0, 0, 0], sizes = [2, 1, 128], strides = [1, 1, 1]} : vector<2x4x128xf32> to vector<2x1x128xf32>
    %87 = vector.shape_cast %86 : vector<2x1x128xf32> to vector<2x128xf32>
    %c704 = arith.constant 704 : index
    %c0_75 = arith.constant 0 : index
    %88 = vector.load %arg1[%c704, %c0_75] : memref<1348x128xf32, #tpu.memory_space<vmem>>, vector<128x128xf32>
    %cst_76 = arith.constant dense<0.000000e+00> : vector<2x128xf32>
    %89 = tpu.matmul %87, %88, %cst_76 {dimension_numbers = #tpu.dot_dimension_numbers<[1], [0], [0], [1], [0, 0, 1, 1], [], []>} : vector<2x128xf32>, vector<128x128xf32>, vector<2x128xf32> -> vector<2x128xf32>
    %90 = vector.broadcast %85 : vector<1x128xf32> to vector<2x128xf32>
    %91 = arith.addf %90, %89 : vector<2x128xf32>
    %92 = vector.extract_strided_slice %84 {offsets = [0, 1, 0], sizes = [2, 1, 128], strides = [1, 1, 1]} : vector<2x4x128xf32> to vector<2x1x128xf32>
    %93 = vector.shape_cast %92 : vector<2x1x128xf32> to vector<2x128xf32>
    %c832 = arith.constant 832 : index
    %c0_77 = arith.constant 0 : index
    %94 = vector.load %arg1[%c832, %c0_77] : memref<1348x128xf32, #tpu.memory_space<vmem>>, vector<128x128xf32>
    %cst_78 = arith.constant dense<0.000000e+00> : vector<2x128xf32>
    %95 = tpu.matmul %93, %94, %cst_78 {dimension_numbers = #tpu.dot_dimension_numbers<[1], [0], [0], [1], [0, 0, 1, 1], [], []>} : vector<2x128xf32>, vector<128x128xf32>, vector<2x128xf32> -> vector<2x128xf32>
    %96 = arith.addf %91, %95 : vector<2x128xf32>
    %97 = vector.extract_strided_slice %84 {offsets = [0, 2, 0], sizes = [2, 1, 128], strides = [1, 1, 1]} : vector<2x4x128xf32> to vector<2x1x128xf32>
    %98 = vector.shape_cast %97 : vector<2x1x128xf32> to vector<2x128xf32>
    %c960 = arith.constant 960 : index
    %c0_79 = arith.constant 0 : index
    %99 = vector.load %arg1[%c960, %c0_79] : memref<1348x128xf32, #tpu.memory_space<vmem>>, vector<128x128xf32>
    %cst_80 = arith.constant dense<0.000000e+00> : vector<2x128xf32>
    %100 = tpu.matmul %98, %99, %cst_80 {dimension_numbers = #tpu.dot_dimension_numbers<[1], [0], [0], [1], [0, 0, 1, 1], [], []>} : vector<2x128xf32>, vector<128x128xf32>, vector<2x128xf32> -> vector<2x128xf32>
    %101 = arith.addf %96, %100 : vector<2x128xf32>
    %102 = vector.extract_strided_slice %84 {offsets = [0, 3, 0], sizes = [2, 1, 128], strides = [1, 1, 1]} : vector<2x4x128xf32> to vector<2x1x128xf32>
    %103 = vector.shape_cast %102 : vector<2x1x128xf32> to vector<2x128xf32>
    %c1088 = arith.constant 1088 : index
    %c0_81 = arith.constant 0 : index
    %104 = vector.load %arg1[%c1088, %c0_81] : memref<1348x128xf32, #tpu.memory_space<vmem>>, vector<128x128xf32>
    %cst_82 = arith.constant dense<0.000000e+00> : vector<2x128xf32>
    %105 = tpu.matmul %103, %104, %cst_82 {dimension_numbers = #tpu.dot_dimension_numbers<[1], [0], [0], [1], [0, 0, 1, 1], [], []>} : vector<2x128xf32>, vector<128x128xf32>, vector<2x128xf32> -> vector<2x128xf32>
    %106 = arith.addf %101, %105 : vector<2x128xf32>
    %cst_83 = arith.constant 0.000000e+00 : f32
    %107 = vector.broadcast %cst_83 : f32 to vector<2x128xf32>
    %108 = arith.maximumf %106, %107 : vector<2x128xf32>
    %c1216 = arith.constant 1216 : index
    %c0_84 = arith.constant 0 : index
    %109 = vector.load %arg1[%c1216, %c0_84] : memref<1348x128xf32, #tpu.memory_space<vmem>>, vector<128x128xf32>
    %cst_85 = arith.constant dense<0.000000e+00> : vector<2x128xf32>
    %110 = tpu.matmul %108, %109, %cst_85 {dimension_numbers = #tpu.dot_dimension_numbers<[1], [0], [0], [1], [0, 0, 1, 1], [], []>} : vector<2x128xf32>, vector<128x128xf32>, vector<2x128xf32> -> vector<2x128xf32>
    %c1347 = arith.constant 1347 : index
    %c0_86 = arith.constant 0 : index
    %111 = vector.load %arg1[%c1347, %c0_86] : memref<1348x128xf32, #tpu.memory_space<vmem>>, vector<1x128xf32>
    %112 = vector.broadcast %111 : vector<1x128xf32> to vector<2x128xf32>
    %113 = arith.addf %110, %112 : vector<2x128xf32>
    %114 = vector.extract_strided_slice %113 {offsets = [0, 0], sizes = [2, 10], strides = [1, 1]} : vector<2x128xf32> to vector<2x10xf32>
    %c0_87 = arith.constant 0 : index
    %c0_88 = arith.constant 0 : index
    %115 = vector.load %arg2[%c0_87, %c0_88] : memref<2x10xf32, #tpu.memory_space<vmem>>, vector<2x10xf32>
    tpu.vector_store %arg2[%c0_87, %c0_88], %114 {strides = array<i32>} : memref<2x10xf32, #tpu.memory_space<vmem>>, vector<2x10xf32>,
    return
  }
}

</mosaic_0001>

<llo_original>
// kernel: vgg_feats_forward.1
$region0: #{vgg_feats_forward.1}
  #allocation0 [shape = 'u32[]', space=smem, size = 0x4, offset = 0x4, fixed_abs, tag = 'smem constant byte address 0x4 - core index']
  #allocation1 [shape = 'u32[144,128]{1,0:T(1,128)}', space=vmem, size = 0x12000, scoped, tag = 'internal scratch']
  #allocation2 [shape = 'f32[2,18,64]{2,1,0:T(8,128)}', space=vmem, size = 0x6000, scoped, tag = 'scratch operand']
  #allocation3 [shape = 'f32[2,10,128]{2,1,0:T(8,128)}', space=vmem, size = 0x4000, scoped, tag = 'scratch operand']
  %s0 = inlined_call_operand.hbm [shape: f32[2,4,16,16], index: 0, kind: input, shape index: {}]
  %s1 = inlined_call_operand.hbm [shape: f32[1348,128], index: 1, kind: input, shape index: {}]
  %s2 = inlined_call_operand.hbm [shape: f32[2,10], index: 2, kind: output, shape index: {}]
  %s3 = sld [smem:[#allocation0]]
  $region26: #{vgg_feats_forward.1} parent=0
    _
  %s5 = ssub.s32 1, %s3
  %s6 = scalar_select 0, %s5, %s3
  $region1: #{vgg_feats_forward.1} parent=0
    #allocation4 [shape = 'u8[65536]{0}', space=vmem, size = 0x10000, scoped, tag = 'input window, operand 0, single buffered']
    #allocation5 [shape = 's32[1]{0}', space=sflag, size = 0x4, scoped, tag = 'scoped memory for vgg_feats_forward.1']
    #allocation6 [shape = 's32[1]{0}', space=sflag, size = 0x4, scoped, tag = 'scoped memory for vgg_feats_forward.1']
    #allocation7 [shape = 'u8[692224]{0}', space=vmem, size = 0xa9000, scoped, tag = 'input window, operand 1, single buffered']
    #allocation8 [shape = 's32[1]{0}', space=sflag, size = 0x4, scoped, tag = 'scoped memory for vgg_feats_forward.1']
    #allocation9 [shape = 'u8[1024]{0}', space=vmem, size = 0x400, scoped, tag = 'output window, operand 0, single buffered']
    %7 = vsyncpa [#allocation5], 0
    %8 = vsyncpa [#allocation8], 0
    %9 = vsyncpa [#allocation6], 0
    // Predicated region
    $region2: #{vgg_feats_forward.1} parent=1 // pred_check
      _
    $region3: #{vgg_feats_forward.1} parent=1 // pred_check_branch
      %11 = sbr.rel (0) target = $region5
    $region4: #{vgg_feats_forward.1} parent=1 // pred_region
      %s13 = ssub.s32 2048, 2048
      %14 = vsyncadd [#allocation5], %s13
      %s15 = sshll.u32 [#allocation4], 4
      %s16 = int_to_ptr.vmem [resolvable:$true] %s15
      %21 = dma.hbm_to_vmem [thread:$0]  %s0, 2048, %s16, [#allocation5], 128, 128, 8
    $region5: #{vgg_feats_forward.1} parent=1 // pred_fallthru
      _
    // Predicated region
    $region6: #{vgg_feats_forward.1} parent=1 // pred_check
      _
    $region7: #{vgg_feats_forward.1} parent=1 // pred_check_branch
      %23 = sbr.rel (0) target = $region9
    $region8: #{vgg_feats_forward.1} parent=1 // pred_region
      %s25 = ssub.s32 21632, 21632
      %26 = vsyncadd [#allocation8], %s25
      %s27 = sshll.u32 [#allocation7], 4
      %s28 = int_to_ptr.vmem [resolvable:$true] %s27
      %33 = dma.hbm_to_vmem [thread:$0]  %s1, 21632, %s28, [#allocation8], 128, 128, 8
    $region9: #{vgg_feats_forward.1} parent=1 // pred_fallthru
      _
    // Predicated region
    $region10: #{vgg_feats_forward.1} parent=1 // pred_check
      _
    $region11: #{vgg_feats_forward.1} parent=1 // pred_check_branch
      %35 = sbr.rel (0) target = $region13
    $region12: #{vgg_feats_forward.1} parent=1 // pred_region
      %36 = dma.done [#allocation5], 2048
    $region13: #{vgg_feats_forward.1} parent=1 // pred_fallthru
      _
    // Predicated region
    $region14: #{vgg_feats_forward.1} parent=1 // pred_check
      _
    $region15: #{vgg_feats_forward.1} parent=1 // pred_check_branch
      %38 = sbr.rel (0) target = $region17
    $region16: #{vgg_feats_forward.1} parent=1 // pred_region
      %39 = dma.done [#allocation8], 21632
    $region17: #{vgg_feats_forward.1} parent=1 // pred_fallthru
      _
    %vm40 = vcmask 516096
    %41 = vst.msk [vmem:[#allocation2] sm:$0x1] %vm40, 0.0
    %42 = vst.msk [vmem:[#allocation2 + $0x18] sm:$0x1] %vm40, 0.0
    %43 = vst.msk [vmem:[#allocation2 + $0x11] sm:$0x1] %vm40, 0.0
    %44 = vst.msk [vmem:[#allocation2 + $0x29] sm:$0x1] %vm40, 0.0
    %v45 = vld [vmem:[#allocation4] sm:$0xff]
    %v46 = vld [vmem:[#allocation4 + $0x8] sm:$0xff]
    %v47 = vld [vmem:[#allocation4 + $0x40] sm:$0xff]
    %v48 = vld [vmem:[#allocation4 + $0x48] sm:$0xff]
    %vm49 = vcmask 130048
    %50 = vst.msk [vmem:[#allocation2 + $0x1] sm:$0xff] %vm49, %v45
    %51 = vst.msk [vmem:[#allocation2 + $0x9] sm:$0xff] %vm49, %v46
    %52 = vst.msk [vmem:[#allocation2 + $0x19] sm:$0xff] %vm49, %v47
    %53 = vst.msk [vmem:[#allocation2 + $0x21] sm:$0xff] %vm49, %v48
    %s54 = scalar_lea.vmem [#allocation4], 16
    %v55 = vld [vmem:[%s54] sm:$0xff]
    %v56 = vld [vmem:[%s54 + $0x8] sm:$0xff]
    %v57 = vld [vmem:[%s54 + $0x40] sm:$0xff]
    %v58 = vld [vmem:[%s54 + $0x48] sm:$0xff]
    %63 = vrot.lane.b32.xlu0 %v55, 16
    %v64 = vpop.permute.xlu0 %63
    %65 = vrot.lane.b32.xlu0 %v56, 16
    %v66 = vpop.permute.xlu0 %65
    %67 = vrot.lane.b32.xlu0 %v57, 16
    %v68 = vpop.permute.xlu0 %67
    %69 = vrot.lane.b32.xlu0 %v58, 16
    %v70 = vpop.permute.xlu0 %69
    %vm75 = vcmask 261248
    %76 = vst.msk [vmem:[#allocation2 + $0x1] sm:$0xff] %vm75, %v64
    %77 = vst.msk [vmem:[#allocation2 + $0x9] sm:$0xff] %vm75, %v66
    %78 = vst.msk [vmem:[#allocation2 + $0x19] sm:$0xff] %vm75, %v68
    %79 = vst.msk [vmem:[#allocation2 + $0x21] sm:$0xff] %vm75, %v70
    %s80 = scalar_lea.vmem [#allocation4], 32
    %v81 = vld [vmem:[%s80] sm:$0xff]
    %v82 = vld [vmem:[%s80 + $0x8] sm:$0xff]
    %v83 = vld [vmem:[%s80 + $0x40] sm:$0xff]
    %v84 = vld [vmem:[%s80 + $0x48] sm:$0xff]
    %89 = vrot.lane.b32.xlu0 %v81, 32
    %v90 = vpop.permute.xlu0 %89
    %91 = vrot.lane.b32.xlu0 %v82, 32
    %v92 = vpop.permute.xlu0 %91
    %93 = vrot.lane.b32.xlu0 %v83, 32
    %v94 = vpop.permute.xlu0 %93
    %95 = vrot.lane.b32.xlu0 %v84, 32
    %v96 = vpop.permute.xlu0 %95
    %vm101 = vcmask 392448
    %102 = vst.msk [vmem:[#allocation2 + $0x1] sm:$0xff] %vm101, %v90
    %103 = vst.msk [vmem:[#allocation2 + $0x9] sm:$0xff] %vm101, %v92
    %104 = vst.msk [vmem:[#allocation2 + $0x19] sm:$0xff] %vm101, %v94
    %105 = vst.msk [vmem:[#allocation2 + $0x21] sm:$0xff] %vm101, %v96
    %s106 = scalar_lea.vmem [#allocation4], 48
    %v107 = vld [vmem:[%s106] sm:$0xff]
    %v108 = vld [vmem:[%s106 + $0x8] sm:$0xff]
    %v109 = vld [vmem:[%s106 + $0x40] sm:$0xff]
    %v110 = vld [vmem:[%s106 + $0x48] sm:$0xff]
    %115 = vrot.lane.b32.xlu0 %v107, 48
    %v116 = vpop.permute.xlu0 %115
    %117 = vrot.lane.b32.xlu0 %v108, 48
    %v118 = vpop.permute.xlu0 %117
    %119 = vrot.lane.b32.xlu0 %v109, 48
    %v120 = vpop.permute.xlu0 %119
    %121 = vrot.lane.b32.xlu0 %v110, 48
    %v122 = vpop.permute.xlu0 %121
    %vm127 = vcmask 523648
    %128 = vst.msk [vmem:[#allocation2 + $0x1] sm:$0xff] %vm127, %v116
    %129 = vst.msk [vmem:[#allocation2 + $0x9] sm:$0xff] %vm127, %v118
    %130 = vst.msk [vmem:[#allocation2 + $0x19] sm:$0xff] %vm127, %v120
    %131 = vst.msk [vmem:[#allocation2 + $0x21] sm:$0xff] %vm127, %v122
    %v132 = vld [vmem:[#allocation2] sm:$0xff]
    %v133 = vld [vmem:[#allocation2 + $0x8] sm:$0xff]
    %v134 = vld [vmem:[#allocation2 + $0x18] sm:$0xff]
    %v135 = vld [vmem:[#allocation2 + $0x20] sm:$0xff]
    %v136 = vld [vmem:[#allocation7] sm:$0xff]
    %v137 = vld [vmem:[#allocation7 + $0x8] sm:$0xff]
    %v138 = vld [vmem:[#allocation7 + $0x10] sm:$0xff]
    %v139 = vld [vmem:[#allocation7 + $0x18] sm:$0xff]
    %v140 = vld [vmem:[#allocation7 + $0x20] sm:$0xff]
    %v141 = vld [vmem:[#allocation7 + $0x28] sm:$0xff]
    %v142 = vld [vmem:[#allocation7 + $0x30] sm:$0xff]
    %v143 = vld [vmem:[#allocation7 + $0x38] sm:$0xff]
    %v144 = vld [vmem:[#allocation2 + $0x1] sm:$0xff]
    %v145 = vld [vmem:[#allocation2 + $0x9] sm:$0xff]
    %v146 = vld [vmem:[#allocation2 + $0x19] sm:$0xff]
    %v147 = vld [vmem:[#allocation2 + $0x21] sm:$0xff]
    %v148 = vld [vmem:[#allocation7 + $0x40] sm:$0xff]
    %v149 = vld [vmem:[#allocation7 + $0x48] sm:$0xff]
    %v150 = vld [vmem:[#allocation7 + $0x50] sm:$0xff]
    %v151 = vld [vmem:[#allocation7 + $0x58] sm:$0xff]
    %v152 = vld [vmem:[#allocation7 + $0x60] sm:$0xff]
    %v153 = vld [vmem:[#allocation7 + $0x68] sm:$0xff]
    %v154 = vld [vmem:[#allocation7 + $0x70] sm:$0xff]
    %v155 = vld [vmem:[#allocation7 + $0x78] sm:$0xff]
    %vm156 = vcmask 523264
    %v158 = vsel %vm156, %v144, 0
    %v161 = vsel %vm156, %v145, 0
    %v164 = vsel %vm156, %v146, 0
    %v167 = vsel %vm156, %v147, 0
    %169 = vmatprep.subr.mxu0 0.0
    %170 = vmatpush1.msra.mxu0 %v148
    %171 = vmatprep.subr.mxu0 0.0
    %172 = vmatpush1.msra.mxu0 %v149
    %173 = vmatprep.subr.mxu0 0.0
    %174 = vmatpush1.msra.mxu0 %v150
    %175 = vmatprep.subr.mxu0 0.0
    %176 = vmatpush1.msra.mxu0 %v151
    %177 = vmatprep.subr.mxu0 0.0
    %178 = vmatpush1.msra.mxu0 %v152
    %179 = vmatprep.subr.mxu0 0.0
    %180 = vmatpush1.msra.mxu0 %v153
    %181 = vmatprep.subr.mxu0 0.0
    %182 = vmatpush1.msra.mxu0 %v154
    %183 = vmatprep.subr.mxu0 0.0
    %184 = vmatpush1.msra.mxu0 %v155
    %185 = vmatprep.subr.mxu0 0.0
    %186 = vmatpush1.msra.mxu0 0.0
    %187 = vmatprep.subr.mxu0 0.0
    %188 = vmatpush1.msra.mxu0 0.0
    %189 = vmatprep.subr.mxu0 0.0
    %190 = vmatpush1.msra.mxu0 0.0
    %191 = vmatprep.subr.mxu0 0.0
    %192 = vmatpush1.msra.mxu0 0.0
    %193 = vmatprep.subr.mxu0 0.0
    %194 = vmatpush1.msra.mxu0 0.0
    %195 = vmatprep.subr.mxu0 0.0
    %196 = vmatpush1.msra.mxu0 0.0
    %197 = vmatprep.subr.mxu0 0.0
    %198 = vmatpush1.msra.mxu0 0.0
    %199 = vmatprep.subr.mxu0 0.0
    %200 = vmatpush1.msra.mxu0 0.0
    %201 = vmatprep.subr.mxu0 0.0
    %202 = vmatpush1.msra.mxu0 0.0
    %203 = vmatprep.subr.mxu0 0.0
    %204 = vmatpush1.msra.mxu0 0.0
    %205 = vmatprep.subr.mxu0 0.0
    %206 = vmatpush1.msra.mxu0 0.0
    %207 = vmatprep.subr.mxu0 0.0
    %208 = vmatpush1.msra.mxu0 0.0
    %209 = vmatprep.subr.mxu0 0.0
    %210 = vmatpush1.msra.mxu0 0.0
    %211 = vmatprep.subr.mxu0 0.0
    %212 = vmatpush1.msra.mxu0 0.0
    %213 = vmatprep.subr.mxu0 0.0
    %214 = vmatpush1.msra.mxu0 0.0
    %215 = vmatprep.subr.mxu0 0.0
    %216 = vmatpush1.msra.mxu0 0.0
    %217 = vmatprep.subr.mxu0 0.0
    %218 = vmatpush1.msra.mxu0 0.0
    %219 = vmatprep.subr.mxu0 0.0
    %220 = vmatpush1.msra.mxu0 0.0
    %221 = vmatprep.subr.mxu0 0.0
    %222 = vmatpush1.msra.mxu0 0.0
    %223 = vmatprep.subr.mxu0 0.0
    %224 = vmatpush1.msra.mxu0 0.0
    %225 = vmatprep.subr.mxu0 0.0
    %226 = vmatpush1.msra.mxu0 0.0
    %227 = vmatprep.subr.mxu0 0.0
    %228 = vmatpush1.msra.mxu0 0.0
    %229 = vmatprep.subr.mxu0 0.0
    %230 = vmatpush1.msra.mxu0 0.0
    %231 = vmatprep.subr.mxu0 0.0
    %232 = vmatpush1.msra.mxu0 0.0
    %233 = vmatprep.mubr.f32.mxu0 0.0
    %234 = vmatmul.mubr.f32.gmra.mrb[0].mxu0 %v158
    %v235 = vpop.f32.mrb[0].mxu0
    %v236 = vadd.f32 0.0, %v235
    %v237 = vpop.f32.mrb[0].mxu0
    %238 = vmatprep.mubr.f32.mxu0 0.0
    %239 = vmatmul.mubr.f32.gmra.mrb[0].mxu0 %v161
    %v240 = vpop.f32.mrb[0].mxu0
    %v241 = vadd.f32 0.0, %v240
    %v242 = vpop.f32.mrb[0].mxu0
    %243 = vmatprep.mubr.f32.mxu0 0.0
    %244 = vmatmul.mubr.f32.gmra.mrb[0].mxu0 %v164
    %v245 = vpop.f32.mrb[0].mxu0
    %v246 = vadd.f32 0.0, %v245
    %v247 = vpop.f32.mrb[0].mxu0
    %248 = vmatprep.mubr.f32.mxu0 0.0
    %249 = vmatmul.mubr.f32.gmra.mrb[0].mxu0 %v167
    %v250 = vpop.f32.mrb[0].mxu0
    %v251 = vadd.f32 0.0, %v250
    %v252 = vpop.f32.mrb[0].mxu0
    %253 = vdwg.mxu0
    %v255 = vsel %vm156, %v132, 0
    %v258 = vsel %vm156, %v133, 0
    %v261 = vsel %vm156, %v134, 0
    %v264 = vsel %vm156, %v135, 0
    %266 = vmatprep.subr.mxu0 0.0
    %267 = vmatpush1.msra.mxu0 %v136
    %268 = vmatprep.subr.mxu0 0.0
    %269 = vmatpush1.msra.mxu0 %v137
    %270 = vmatprep.subr.mxu0 0.0
    %271 = vmatpush1.msra.mxu0 %v138
    %272 = vmatprep.subr.mxu0 0.0
    %273 = vmatpush1.msra.mxu0 %v139
    %274 = vmatprep.subr.mxu0 0.0
    %275 = vmatpush1.msra.mxu0 %v140
    %276 = vmatprep.subr.mxu0 0.0
    %277 = vmatpush1.msra.mxu0 %v141
    %278 = vmatprep.subr.mxu0 0.0
    %279 = vmatpush1.msra.mxu0 %v142
    %280 = vmatprep.subr.mxu0 0.0
    %281 = vmatpush1.msra.mxu0 %v143
    %282 = vmatprep.subr.mxu0 0.0
    %283 = vmatpush1.msra.mxu0 0.0
    %284 = vmatprep.subr.mxu0 0.0
    %285 = vmatpush1.msra.mxu0 0.0
    %286 = vmatprep.subr.mxu0 0.0
    %287 = vmatpush1.msra.mxu0 0.0
    %288 = vmatprep.subr.mxu0 0.0
    %289 = vmatpush1.msra.mxu0 0.0
    %290 = vmatprep.subr.mxu0 0.0
    %291 = vmatpush1.msra.mxu0 0.0
    %292 = vmatprep.subr.mxu0 0.0
    %293 = vmatpush1.msra.mxu0 0.0
    %294 = vmatprep.subr.mxu0 0.0
    %295 = vmatpush1.msra.mxu0 0.0
    %296 = vmatprep.subr.mxu0 0.0
    %297 = vmatpush1.msra.mxu0 0.0
    %298 = vmatprep.subr.mxu0 0.0
    %299 = vmatpush1.msra.mxu0 0.0
    %300 = vmatprep.subr.mxu0 0.0
    %301 = vmatpush1.msra.mxu0 0.0
    %302 = vmatprep.subr.mxu0 0.0
    %303 = vmatpush1.msra.mxu0 0.0
    %304 = vmatprep.subr.mxu0 0.0
    %305 = vmatpush1.msra.mxu0 0.0
    %306 = vmatprep.subr.mxu0 0.0
    %307 = vmatpush1.msra.mxu0 0.0
    %308 = vmatprep.subr.mxu0 0.0
    %309 = vmatpush1.msra.mxu0 0.0
    %310 = vmatprep.subr.mxu0 0.0
    %311 = vmatpush1.msra.mxu0 0.0
    %312 = vmatprep.subr.mxu0 0.0
    %313 = vmatpush1.msra.mxu0 0.0
    %314 = vmatprep.subr.mxu0 0.0
    %315 = vmatpush1.msra.mxu0 0.0
    %316 = vmatprep.subr.mxu0 0.0
    %317 = vmatpush1.msra.mxu0 0.0
    %318 = vmatprep.subr.mxu0 0.0
    %319 = vmatpush1.msra.mxu0 0.0
    %320 = vmatprep.subr.mxu0 0.0
    %321 = vmatpush1.msra.mxu0 0.0
    %322 = vmatprep.subr.mxu0 0.0
    %323 = vmatpush1.msra.mxu0 0.0
    %324 = vmatprep.subr.mxu0 0.0
    %325 = vmatpush1.msra.mxu0 0.0
    %326 = vmatprep.subr.mxu0 0.0
    %327 = vmatpush1.msra.mxu0 0.0
    %328 = vmatprep.subr.mxu0 0.0
    %329 = vmatpush1.msra.mxu0 0.0
    %330 = vmatprep.mubr.f32.mxu0 0.0
    %331 = vmatmul.mubr.f32.gmra.mrb[0].mxu0 %v255
    %v332 = vpop.f32.mrb[0].mxu0
    %v333 = vadd.f32 %v236, %v332
    %v334 = vpop.f32.mrb[0].mxu0
    %335 = vmatprep.mubr.f32.mxu0 0.0
    %336 = vmatmul.mubr.f32.gmra.mrb[0].mxu0 %v258
    %v337 = vpop.f32.mrb[0].mxu0
    %v338 = vadd.f32 %v241, %v337
    %v339 = vpop.f32.mrb[0].mxu0
    %340 = vmatprep.mubr.f32.mxu0 0.0
    %341 = vmatmul.mubr.f32.gmra.mrb[0].mxu0 %v261
    %v342 = vpop.f32.mrb[0].mxu0
    %v343 = vadd.f32 %v246, %v342
    %v344 = vpop.f32.mrb[0].mxu0
    %345 = vmatprep.mubr.f32.mxu0 0.0
    %346 = vmatmul.mubr.f32.gmra.mrb[0].mxu0 %v264
    %v347 = vpop.f32.mrb[0].mxu0
    %v348 = vadd.f32 %v251, %v347
    %v349 = vpop.f32.mrb[0].mxu0
    %350 = vdwg.mxu0
    %v351 = vld [vmem:[#allocation2 + $0x2] sm:$0xff]
    %v352 = vld [vmem:[#allocation2 + $0xa] sm:$0xff]
    %v353 = vld [vmem:[#allocation2 + $0x1a] sm:$0xff]
    %v354 = vld [vmem:[#allocation2 + $0x22] sm:$0xff]
    %v355 = vld [vmem:[#allocation7 + $0x80] sm:$0xff]
    %v356 = vld [vmem:[#allocation7 + $0x88] sm:$0xff]
    %v357 = vld [vmem:[#allocation7 + $0x90] sm:$0xff]
    %v358 = vld [vmem:[#allocation7 + $0x98] sm:$0xff]
    %v359 = vld [vmem:[#allocation7 + $0xa0] sm:$0xff]
    %v360 = vld [vmem:[#allocation7 + $0xa8] sm:$0xff]
    %v361 = vld [vmem:[#allocation7 + $0xb0] sm:$0xff]
    %v362 = vld [vmem:[#allocation7 + $0xb8] sm:$0xff]
    %v364 = vsel %vm156, %v351, 0
    %v367 = vsel %vm156, %v352, 0
    %v370 = vsel %vm156, %v353, 0
    %v373 = vsel %vm156, %v354, 0
    %375 = vmatprep.subr.mxu0 0.0
    %376 = vmatpush1.msra.mxu0 %v355
    %377 = vmatprep.subr.mxu0 0.0
    %378 = vmatpush1.msra.mxu0 %v356
    %379 = vmatprep.subr.mxu0 0.0
    %380 = vmatpush1.msra.mxu0 %v357
    %381 = vmatprep.subr.mxu0 0.0
    %382 = vmatpush1.msra.mxu0 %v358
    %383 = vmatprep.subr.mxu0 0.0
    %384 = vmatpush1.msra.mxu0 %v359
    %385 = vmatprep.subr.mxu0 0.0
    %386 = vmatpush1.msra.mxu0 %v360
    %387 = vmatprep.subr.mxu0 0.0
    %388 = vmatpush1.msra.mxu0 %v361
    %389 = vmatprep.subr.mxu0 0.0
    %390 = vmatpush1.msra.mxu0 %v362
    %391 = vmatprep.subr.mxu0 0.0
    %392 = vmatpush1.msra.mxu0 0.0
    %393 = vmatprep.subr.mxu0 0.0
    %394 = vmatpush1.msra.mxu0 0.0
    %395 = vmatprep.subr.mxu0 0.0
    %396 = vmatpush1.msra.mxu0 0.0
    %397 = vmatprep.subr.mxu0 0.0
    %398 = vmatpush1.msra.mxu0 0.0
    %399 = vmatprep.subr.mxu0 0.0
    %400 = vmatpush1.msra.mxu0 0.0
    %401 = vmatprep.subr.mxu0 0.0
    %402 = vmatpush1.msra.mxu0 0.0
    %403 = vmatprep.subr.mxu0 0.0
    %404 = vmatpush1.msra.mxu0 0.0
    %405 = vmatprep.subr.mxu0 0.0
    %406 = vmatpush1.msra.mxu0 0.0
    %407 = vmatprep.subr.mxu0 0.0
    %408 = vmatpush1.msra.mxu0 0.0
    %409 = vmatprep.subr.mxu0 0.0
    %410 = vmatpush1.msra.mxu0 0.0
    %411 = vmatprep.subr.mxu0 0.0
    %412 = vmatpush1.msra.mxu0 0.0
    %413 = vmatprep.subr.mxu0 0.0
    %414 = vmatpush1.msra.mxu0 0.0
    %415 = vmatprep.subr.mxu0 0.0
    %416 = vmatpush1.msra.mxu0 0.0
    %417 = vmatprep.subr.mxu0 0.0
    %418 = vmatpush1.msra.mxu0 0.0
    %419 = vmatprep.subr.mxu0 0.0
    %420 = vmatpush1.msra.mxu0 0.0
    %421 = vmatprep.subr.mxu0 0.0
    %422 = vmatpush1.msra.mxu0 0.0
    %423 = vmatprep.subr.mxu0 0.0
    %424 = vmatpush1.msra.mxu0 0.0
    %425 = vmatprep.subr.mxu0 0.0
    %426 = vmatpush1.msra.mxu0 0.0
    %427 = vmatprep.subr.mxu0 0.0
    %428 = vmatpush1.msra.mxu0 0.0
    %429 = vmatprep.subr.mxu0 0.0
    %430 = vmatpush1.msra.mxu0 0.0
    %431 = vmatprep.subr.mxu0 0.0
    %432 = vmatpush1.msra.mxu0 0.0
    %433 = vmatprep.subr.mxu0 0.0
    %434 = vmatpush1.msra.mxu0 0.0
    %435 = vmatprep.subr.mxu0 0.0
    %436 = vmatpush1.msra.mxu0 0.0
    %437 = vmatprep.subr.mxu0 0.0
    %438 = vmatpush1.msra.mxu0 0.0
    %439 = vmatprep.mubr.f32.mxu0 0.0
    %440 = vmatmul.mubr.f32.gmra.mrb[0].mxu0 %v364
    %v441 = vpop.f32.mrb[0].mxu0
    %v442 = vadd.f32 0.0, %v441
    %v443 = vpop.f32.mrb[0].mxu0
    %444 = vmatprep.mubr.f32.mxu0 0.0
    %445 = vmatmul.mubr.f32.gmra.mrb[0].mxu0 %v367
    %v446 = vpop.f32.mrb[0].mxu0
    %v447 = vadd.f32 0.0, %v446
    %v448 = vpop.f32.mrb[0].mxu0
    %449 = vmatprep.mubr.f32.mxu0 0.0
    %450 = vmatmul.mubr.f32.gmra.mrb[0].mxu0 %v370
    %v451 = vpop.f32.mrb[0].mxu0
    %v452 = vadd.f32 0.0, %v451
    %v453 = vpop.f32.mrb[0].mxu0
    %454 = vmatprep.mubr.f32.mxu0 0.0
    %455 = vmatmul.mubr.f32.gmra.mrb[0].mxu0 %v373
    %v456 = vpop.f32.mrb[0].mxu0
    %v457 = vadd.f32 0.0, %v456
    %v458 = vpop.f32.mrb[0].mxu0
    %459 = vdwg.mxu0
    %v460 = vadd.f32 %v333, %v442
    %v461 = vadd.f32 %v338, %v447
    %v462 = vadd.f32 %v343, %v452
    %v463 = vadd.f32 %v348, %v457
    %v464 = vld [vmem:[#allocation7 + $0x540] sm:$0x1]
    %v465 = vlaneseq
    %v466 = vshrl.u32 %v465, 7
    %v467 = vsub.s32 0, %v466
    %v468 = vrot.slane %v464, %v467
    %v469 = vadd.f32 %v460, %v468
    %v470 = vadd.f32 %v461, %v468
    %v471 = vadd.f32 %v462, %v468
    %v472 = vadd.f32 %v463, %v468
    %v473 = vmax.f32 %v469, 0.0
    %v474 = vmax.f32 %v470, 0.0
    %v475 = vmax.f32 %v471, 0.0
    %v476 = vmax.f32 %v472, 0.0
    %v481 = vcombine.high %v473, %v473
    %v483 = vunpack.c.l.s4 1983009808
    %v484 = vunpack.c.0.s8 %v483
    %v485 = vlaneseq
    %v486 = vshrl.u32 %v485, 7
    %v487 = vsub.s32 %v484, %v486
    %v488 = vrot.slane %v473, %v487
    %v490 = vunpack.c.l.s4 1983009808
    %v491 = vunpack.c.0.s8 %v490
    %v492 = vlaneseq
    %v493 = vshrl.u32 %v492, 7
    %v494 = vsub.s32 %v491, %v493
    %v495 = vrot.slane %v481, %v494
    %v496 = vcombine.high %v488, %v488
    %v497 = vcombine.high %v495, %v495
    %v498 = vcombine.high %v474, %v474
    %v500 = vunpack.c.l.s4 1983009808
    %v501 = vunpack.c.0.s8 %v500
    %v502 = vlaneseq
    %v503 = vshrl.u32 %v502, 7
    %v504 = vsub.s32 %v501, %v503
    %v505 = vrot.slane %v474, %v504
    %v507 = vunpack.c.l.s4 1983009808
    %v508 = vunpack.c.0.s8 %v507
    %v509 = vlaneseq
    %v510 = vshrl.u32 %v509, 7
    %v511 = vsub.s32 %v508, %v510
    %v512 = vrot.slane %v498, %v511
    %v513 = vcombine.high %v505, %v505
    %v514 = vcombine.high %v512, %v512
    %v515 = vcombine.high %v475, %v475
    %v517 = vunpack.c.l.s4 1983009808
    %v518 = vunpack.c.0.s8 %v517
    %v519 = vlaneseq
    %v520 = vshrl.u32 %v519, 7
    %v521 = vsub.s32 %v518, %v520
    %v522 = vrot.slane %v475, %v521
    %v524 = vunpack.c.l.s4 1983009808
    %v525 = vunpack.c.0.s8 %v524
    %v526 = vlaneseq
    %v527 = vshrl.u32 %v526, 7
    %v528 = vsub.s32 %v525, %v527
    %v529 = vrot.slane %v515, %v528
    %v530 = vcombine.high %v522, %v522
    %v531 = vcombine.high %v529, %v529
    %v532 = vcombine.high %v476, %v476
    %v534 = vunpack.c.l.s4 1983009808
    %v535 = vunpack.c.0.s8 %v534
    %v536 = vlaneseq
    %v537 = vshrl.u32 %v536, 7
    %v538 = vsub.s32 %v535, %v537
    %v539 = vrot.slane %v476, %v538
    %v541 = vunpack.c.l.s4 1983009808
    %v542 = vunpack.c.0.s8 %v541
    %v543 = vlaneseq
    %v544 = vshrl.u32 %v543, 7
    %v545 = vsub.s32 %v542, %v544
    %v546 = vrot.slane %v532, %v545
    %v547 = vcombine.high %v539, %v539
    %v548 = vcombine.high %v546, %v546
    %v565 = vrot.slane %v488, 7
    %v566 = vrot.slane %v565, 2
    %v567 = vrot.slane %v496, 7
    %v568 = vrot.slane %v567, 2
    %v569 = vrot.slane %v495, 7
    %v570 = vrot.slane %v569, 2
    %v571 = vrot.slane %v497, 7
    %v572 = vrot.slane %v571, 2
    %v573 = vrot.slane %v505, 7
    %v574 = vrot.slane %v573, 2
    %v575 = vrot.slane %v513, 7
    %v576 = vrot.slane %v575, 2
    %v577 = vrot.slane %v512, 7
    %v578 = vrot.slane %v577, 2
    %v579 = vrot.slane %v514, 7
    %v580 = vrot.slane %v579, 2
    %v581 = vrot.slane %v522, 7
    %v582 = vrot.slane %v581, 2
    %v583 = vrot.slane %v530, 7
    %v584 = vrot.slane %v583, 2
    %v585 = vrot.slane %v529, 7
    %v586 = vrot.slane %v585, 2
    %v587 = vrot.slane %v531, 7
    %v588 = vrot.slane %v587, 2
    %v589 = vrot.slane %v539, 7
    %v590 = vrot.slane %v589, 2
    %v591 = vrot.slane %v547, 7
    %v592 = vrot.slane %v591, 2
    %v593 = vrot.slane %v546, 7
    %v594 = vrot.slane %v593, 2
    %v595 = vrot.slane %v548, 7
    %v596 = vrot.slane %v595, 2
    %v613 = vmax.f32 %v488, %v566
    %v614 = vmax.f32 %v496, %v568
    %v615 = vmax.f32 %v495, %v570
    %v616 = vmax.f32 %v497, %v572
    %v617 = vmax.f32 %v505, %v574
    %v618 = vmax.f32 %v513, %v576
    %v619 = vmax.f32 %v512, %v578
    %v620 = vmax.f32 %v514, %v580
    %v621 = vmax.f32 %v522, %v582
    %v622 = vmax.f32 %v530, %v584
    %v623 = vmax.f32 %v529, %v586
    %v624 = vmax.f32 %v531, %v588
    %v625 = vmax.f32 %v539, %v590
    %v626 = vmax.f32 %v547, %v592
    %v627 = vmax.f32 %v546, %v594
    %v628 = vmax.f32 %v548, %v596
    %v645 = vlaneseq
    %v646 = vshrl.u32 %v645, 7
    %v647 = vsub.s32 0, %v646
    %v648 = vrot.slane %v613, %v647
    %v649 = vlaneseq
    %v650 = vshrl.u32 %v649, 7
    %v651 = vsub.s32 0, %v650
    %v652 = vrot.slane %v614, %v651
    %v653 = vlaneseq
    %v654 = vshrl.u32 %v653, 7
    %v655 = vsub.s32 0, %v654
    %v656 = vrot.slane %v615, %v655
    %v657 = vlaneseq
    %v658 = vshrl.u32 %v657, 7
    %v659 = vsub.s32 0, %v658
    %v660 = vrot.slane %v616, %v659
    %v661 = vlaneseq
    %v662 = vshrl.u32 %v661, 7
    %v663 = vsub.s32 0, %v662
    %v664 = vrot.slane %v617, %v663
    %v665 = vlaneseq
    %v666 = vshrl.u32 %v665, 7
    %v667 = vsub.s32 0, %v666
    %v668 = vrot.slane %v618, %v667
    %v669 = vlaneseq
    %v670 = vshrl.u32 %v669, 7
    %v671 = vsub.s32 0, %v670
    %v672 = vrot.slane %v619, %v671
    %v673 = vlaneseq
    %v674 = vshrl.u32 %v673, 7
    %v675 = vsub.s32 0, %v674
    %v676 = vrot.slane %v620, %v675
    %v677 = vlaneseq
    %v678 = vshrl.u32 %v677, 7
    %v679 = vsub.s32 0, %v678
    %v680 = vrot.slane %v621, %v679
    %v681 = vlaneseq
    %v682 = vshrl.u32 %v681, 7
    %v683 = vsub.s32 0, %v682
    %v684 = vrot.slane %v622, %v683
    %v685 = vlaneseq
    %v686 = vshrl.u32 %v685, 7
    %v687 = vsub.s32 0, %v686
    %v688 = vrot.slane %v623, %v687
    %v689 = vlaneseq
    %v690 = vshrl.u32 %v689, 7
    %v691 = vsub.s32 0, %v690
    %v692 = vrot.slane %v624, %v691
    %v693 = vlaneseq
    %v694 = vshrl.u32 %v693, 7
    %v695 = vsub.s32 0, %v694
    %v696 = vrot.slane %v625, %v695
    %v697 = vlaneseq
    %v698 = vshrl.u32 %v697, 7
    %v699 = vsub.s32 0, %v698
    %v700 = vrot.slane %v626, %v699
    %v701 = vlaneseq
    %v702 = vshrl.u32 %v701, 7
    %v703 = vsub.s32 0, %v702
    %v704 = vrot.slane %v627, %v703
    %v705 = vlaneseq
    %v706 = vshrl.u32 %v705, 7
    %v707 = vsub.s32 0, %v706
    %v708 = vrot.slane %v628, %v707
    %vm709 = vcmask 1041409
    %v710 = vsel %vm709, %v652, %v648
    %vm711 = vcmask 1042434
    %v712 = vsel %vm711, %v656, %v710
    %vm713 = vcmask 1043459
    %v714 = vsel %vm713, %v660, %v712
    %vm715 = vcmask 1044484
    %v716 = vsel %vm715, %v664, %v714
    %vm717 = vcmask 1045509
    %v718 = vsel %vm717, %v668, %v716
    %vm719 = vcmask 1046534
    %v720 = vsel %vm719, %v672, %v718
    %vm721 = vcmask 1047559
    %v722 = vsel %vm721, %v676, %v720
    %v723 = vsel %vm709, %v684, %v680
    %v724 = vsel %vm711, %v688, %v723
    %v725 = vsel %vm713, %v692, %v724
    %v726 = vsel %vm715, %v696, %v725
    %v727 = vsel %vm717, %v700, %v726
    %v728 = vsel %vm719, %v704, %v727
    %v729 = vsel %vm721, %v708, %v728
    %730 = vrot.lane.b32.xlu0 %v722, 120
    %v731 = vpop.permute.xlu0 %730
    %732 = vrot.lane.b32.xlu0 %v729, 120
    %v733 = vpop.permute.xlu0 %732
    %v738 = vcombine.high %v731, %v731
    %v740 = vunpack.c.l.s4 1983009808
    %v741 = vunpack.c.0.s8 %v740
    %v742 = vlaneseq
    %v743 = vshrl.u32 %v742, 7
    %v744 = vsub.s32 %v741, %v743
    %v745 = vrot.slane %v731, %v744
    %v747 = vunpack.c.l.s4 1983009808
    %v748 = vunpack.c.0.s8 %v747
    %v749 = vlaneseq
    %v750 = vshrl.u32 %v749, 7
    %v751 = vsub.s32 %v748, %v750
    %v752 = vrot.slane %v738, %v751
    %v753 = vcombine.high %v745, %v745
    %v754 = vcombine.high %v752, %v752
    %v755 = vcombine.high %v733, %v733
    %v757 = vunpack.c.l.s4 1983009808
    %v758 = vunpack.c.0.s8 %v757
    %v759 = vlaneseq
    %v760 = vshrl.u32 %v759, 7
    %v761 = vsub.s32 %v758, %v760
    %v762 = vrot.slane %v733, %v761
    %v764 = vunpack.c.l.s4 1983009808
    %v765 = vunpack.c.0.s8 %v764
    %v766 = vlaneseq
    %v767 = vshrl.u32 %v766, 7
    %v768 = vsub.s32 %v765, %v767
    %v769 = vrot.slane %v755, %v768
    %v770 = vcombine.high %v762, %v762
    %v771 = vcombine.high %v769, %v769
    %v772 = vrot.slane %v745, 1
    %v773 = vrot.slane %v753, 1
    %v774 = vrot.slane %v752, 1
    %v775 = vrot.slane %v754, 1
    %v776 = vrot.slane %v762, 1
    %v777 = vrot.slane %v770, 1
    %v778 = vrot.slane %v769, 1
    %v779 = vrot.slane %v771, 1
    %v796 = vmax.f32 %v613, %v745
    %v797 = vmax.f32 %v614, %v772
    %v798 = vmax.f32 %v615, %v753
    %v799 = vmax.f32 %v616, %v773
    %v800 = vmax.f32 %v617, %v752
    %v801 = vmax.f32 %v618, %v774
    %v802 = vmax.f32 %v619, %v754
    %v803 = vmax.f32 %v620, %v775
    %v804 = vmax.f32 %v621, %v762
    %v805 = vmax.f32 %v622, %v776
    %v806 = vmax.f32 %v623, %v770
    %v807 = vmax.f32 %v624, %v777
    %v808 = vmax.f32 %v625, %v769
    %v809 = vmax.f32 %v626, %v778
    %v810 = vmax.f32 %v627, %v771
    %v811 = vmax.f32 %v628, %v779
    %v812 = vld [vmem:[#allocation7 + $0x240] sm:$0xff]
    %v813 = vld [vmem:[#allocation7 + $0x248] sm:$0xff]
    %v814 = vld [vmem:[#allocation7 + $0x250] sm:$0xff]
    %v815 = vld [vmem:[#allocation7 + $0x258] sm:$0xff]
    %v816 = vld [vmem:[#allocation7 + $0x260] sm:$0xff]
    %v817 = vld [vmem:[#allocation7 + $0x268] sm:$0xff]
    %v818 = vld [vmem:[#allocation7 + $0x270] sm:$0xff]
    %v819 = vld [vmem:[#allocation7 + $0x278] sm:$0xff]
    %v820 = vld [vmem:[#allocation7 + $0x280] sm:$0xff]
    %v821 = vld [vmem:[#allocation7 + $0x288] sm:$0xff]
    %v822 = vld [vmem:[#allocation7 + $0x290] sm:$0xff]
    %v823 = vld [vmem:[#allocation7 + $0x298] sm:$0xff]
    %v824 = vld [vmem:[#allocation7 + $0x2a0] sm:$0xff]
    %v825 = vld [vmem:[#allocation7 + $0x2a8] sm:$0xff]
    %v826 = vld [vmem:[#allocation7 + $0x2b0] sm:$0xff]
    %v827 = vld [vmem:[#allocation7 + $0x2b8] sm:$0xff]
    %v844 = vlaneseq
    %v845 = vshrl.u32 %v844, 7
    %v846 = vsub.s32 0, %v845
    %v847 = vrot.slane %v796, %v846
    %v848 = vlaneseq
    %v849 = vshrl.u32 %v848, 7
    %v850 = vsub.s32 0, %v849
    %v851 = vrot.slane %v797, %v850
    %v852 = vlaneseq
    %v853 = vshrl.u32 %v852, 7
    %v854 = vsub.s32 0, %v853
    %v855 = vrot.slane %v798, %v854
    %v856 = vlaneseq
    %v857 = vshrl.u32 %v856, 7
    %v858 = vsub.s32 0, %v857
    %v859 = vrot.slane %v799, %v858
    %v860 = vlaneseq
    %v861 = vshrl.u32 %v860, 7
    %v862 = vsub.s32 0, %v861
    %v863 = vrot.slane %v800, %v862
    %v864 = vlaneseq
    %v865 = vshrl.u32 %v864, 7
    %v866 = vsub.s32 0, %v865
    %v867 = vrot.slane %v801, %v866
    %v868 = vlaneseq
    %v869 = vshrl.u32 %v868, 7
    %v870 = vsub.s32 0, %v869
    %v871 = vrot.slane %v802, %v870
    %v872 = vlaneseq
    %v873 = vshrl.u32 %v872, 7
    %v874 = vsub.s32 0, %v873
    %v875 = vrot.slane %v803, %v874
    %v876 = vlaneseq
    %v877 = vshrl.u32 %v876, 7
    %v878 = vsub.s32 0, %v877
    %v879 = vrot.slane %v804, %v878
    %v880 = vlaneseq
    %v881 = vshrl.u32 %v880, 7
    %v882 = vsub.s32 0, %v881
    %v883 = vrot.slane %v805, %v882
    %v884 = vlaneseq
    %v885 = vshrl.u32 %v884, 7
    %v886 = vsub.s32 0, %v885
    %v887 = vrot.slane %v806, %v886
    %v888 = vlaneseq
    %v889 = vshrl.u32 %v888, 7
    %v890 = vsub.s32 0, %v889
    %v891 = vrot.slane %v807, %v890
    %v892 = vlaneseq
    %v893 = vshrl.u32 %v892, 7
    %v894 = vsub.s32 0, %v893
    %v895 = vrot.slane %v808, %v894
    %v896 = vlaneseq
    %v897 = vshrl.u32 %v896, 7
    %v898 = vsub.s32 0, %v897
    %v899 = vrot.slane %v809, %v898
    %v900 = vlaneseq
    %v901 = vshrl.u32 %v900, 7
    %v902 = vsub.s32 0, %v901
    %v903 = vrot.slane %v810, %v902
    %v904 = vlaneseq
    %v905 = vshrl.u32 %v904, 7
    %v906 = vsub.s32 0, %v905
    %v907 = vrot.slane %v811, %v906
    %v908 = vsel %vm709, %v851, %v847
    %v909 = vsel %vm711, %v855, %v908
    %v910 = vsel %vm713, %v859, %v909
    %v911 = vsel %vm715, %v863, %v910
    %v912 = vsel %vm717, %v867, %v911
    %v913 = vsel %vm719, %v871, %v912
    %v914 = vsel %vm721, %v875, %v913
    %v915 = vsel %vm709, %v883, %v879
    %v916 = vsel %vm711, %v887, %v915
    %v917 = vsel %vm713, %v891, %v916
    %v918 = vsel %vm715, %v895, %v917
    %v919 = vsel %vm717, %v899, %v918
    %v920 = vsel %vm719, %v903, %v919
    %v921 = vsel %vm721, %v907, %v920
    %924 = vmatprep.subr.mxu0 0.0
    %925 = vmatpush1.msra.mxu0 %v812
    %926 = vmatprep.subr.mxu0 0.0
    %927 = vmatpush1.msra.mxu0 %v813
    %928 = vmatprep.subr.mxu0 0.0
    %929 = vmatpush1.msra.mxu0 %v814
    %930 = vmatprep.subr.mxu0 0.0
    %931 = vmatpush1.msra.mxu0 %v815
    %932 = vmatprep.subr.mxu0 0.0
    %933 = vmatpush1.msra.mxu0 %v816
    %934 = vmatprep.subr.mxu0 0.0
    %935 = vmatpush1.msra.mxu0 %v817
    %936 = vmatprep.subr.mxu0 0.0
    %937 = vmatpush1.msra.mxu0 %v818
    %938 = vmatprep.subr.mxu0 0.0
    %939 = vmatpush1.msra.mxu0 %v819
    %940 = vmatprep.subr.mxu0 0.0
    %941 = vmatpush1.msra.mxu0 %v820
    %942 = vmatprep.subr.mxu0 0.0
    %943 = vmatpush1.msra.mxu0 %v821
    %944 = vmatprep.subr.mxu0 0.0
    %945 = vmatpush1.msra.mxu0 %v822
    %946 = vmatprep.subr.mxu0 0.0
    %947 = vmatpush1.msra.mxu0 %v823
    %948 = vmatprep.subr.mxu0 0.0
    %949 = vmatpush1.msra.mxu0 %v824
    %950 = vmatprep.subr.mxu0 0.0
    %951 = vmatpush1.msra.mxu0 %v825
    %952 = vmatprep.subr.mxu0 0.0
    %953 = vmatpush1.msra.mxu0 %v826
    %954 = vmatprep.subr.mxu0 0.0
    %955 = vmatpush1.msra.mxu0 %v827
    %956 = vmatprep.subr.mxu0 0.0
    %957 = vmatpush1.msra.mxu0 0.0
    %958 = vmatprep.subr.mxu0 0.0
    %959 = vmatpush1.msra.mxu0 0.0
    %960 = vmatprep.subr.mxu0 0.0
    %961 = vmatpush1.msra.mxu0 0.0
    %962 = vmatprep.subr.mxu0 0.0
    %963 = vmatpush1.msra.mxu0 0.0
    %964 = vmatprep.subr.mxu0 0.0
    %965 = vmatpush1.msra.mxu0 0.0
    %966 = vmatprep.subr.mxu0 0.0
    %967 = vmatpush1.msra.mxu0 0.0
    %968 = vmatprep.subr.mxu0 0.0
    %969 = vmatpush1.msra.mxu0 0.0
    %970 = vmatprep.subr.mxu0 0.0
    %971 = vmatpush1.msra.mxu0 0.0
    %972 = vmatprep.subr.mxu0 0.0
    %973 = vmatpush1.msra.mxu0 0.0
    %974 = vmatprep.subr.mxu0 0.0
    %975 = vmatpush1.msra.mxu0 0.0
    %976 = vmatprep.subr.mxu0 0.0
    %977 = vmatpush1.msra.mxu0 0.0
    %978 = vmatprep.subr.mxu0 0.0
    %979 = vmatpush1.msra.mxu0 0.0
    %980 = vmatprep.subr.mxu0 0.0
    %981 = vmatpush1.msra.mxu0 0.0
    %982 = vmatprep.subr.mxu0 0.0
    %983 = vmatpush1.msra.mxu0 0.0
    %984 = vmatprep.subr.mxu0 0.0
    %985 = vmatpush1.msra.mxu0 0.0
    %986 = vmatprep.subr.mxu0 0.0
    %987 = vmatpush1.msra.mxu0 0.0
    %988 = vmatprep.mubr.f32.mxu0 0.0
    %989 = vmatmul.mubr.f32.gmra.mrb[0].mxu0 %v914
    %v990 = vpop.f32.mrb[0].mxu0
    %v991 = vadd.f32 0.0, %v990
    %v992 = vpop.f32.mrb[0].mxu0
    %993 = vmatprep.mubr.f32.mxu0 0.0
    %994 = vmatmul.mubr.f32.gmra.mrb[0].mxu0 %v921
    %v995 = vpop.f32.mrb[0].mxu0
    %v996 = vadd.f32 0.0, %v995
    %v997 = vpop.f32.mrb[0].mxu0
    %998 = vdwg.mxu0
    %999 = vst [vmem:[#allocation3 + $0x1] sm:$0xff] %v991
    %1000 = vst [vmem:[#allocation3 + $0x11] sm:$0xff] %v996
    %1001 = vst [vmem:[#allocation3] sm:$0x1] 0.0
    %1002 = vst [vmem:[#allocation3 + $0x10] sm:$0x1] 0.0
    %1003 = vst [vmem:[#allocation3 + $0x9] sm:$0x1] 0.0
    %1004 = vst [vmem:[#allocation3 + $0x19] sm:$0x1] 0.0
    %v1005 = vld [vmem:[#allocation3] sm:$0xff]
    %v1006 = vld [vmem:[#allocation3 + $0x10] sm:$0xff]
    %v1007 = vld [vmem:[#allocation7 + $0xc0] sm:$0xff]
    %v1008 = vld [vmem:[#allocation7 + $0xc8] sm:$0xff]
    %v1009 = vld [vmem:[#allocation7 + $0xd0] sm:$0xff]
    %v1010 = vld [vmem:[#allocation7 + $0xd8] sm:$0xff]
    %v1011 = vld [vmem:[#allocation7 + $0xe0] sm:$0xff]
    %v1012 = vld [vmem:[#allocation7 + $0xe8] sm:$0xff]
    %v1013 = vld [vmem:[#allocation7 + $0xf0] sm:$0xff]
    %v1014 = vld [vmem:[#allocation7 + $0xf8] sm:$0xff]
    %v1015 = vld [vmem:[#allocation7 + $0x100] sm:$0xff]
    %v1016 = vld [vmem:[#allocation7 + $0x108] sm:$0xff]
    %v1017 = vld [vmem:[#allocation7 + $0x110] sm:$0xff]
    %v1018 = vld [vmem:[#allocation7 + $0x118] sm:$0xff]
    %v1019 = vld [vmem:[#allocation7 + $0x120] sm:$0xff]
    %v1020 = vld [vmem:[#allocation7 + $0x128] sm:$0xff]
    %v1021 = vld [vmem:[#allocation7 + $0x130] sm:$0xff]
    %v1022 = vld [vmem:[#allocation7 + $0x138] sm:$0xff]
    %v1023 = vld [vmem:[#allocation3 + $0x1] sm:$0xff]
    %v1024 = vld [vmem:[#allocation3 + $0x11] sm:$0xff]
    %v1025 = vld [vmem:[#allocation7 + $0x140] sm:$0xff]
    %v1026 = vld [vmem:[#allocation7 + $0x148] sm:$0xff]
    %v1027 = vld [vmem:[#allocation7 + $0x150] sm:$0xff]
    %v1028 = vld [vmem:[#allocation7 + $0x158] sm:$0xff]
    %v1029 = vld [vmem:[#allocation7 + $0x160] sm:$0xff]
    %v1030 = vld [vmem:[#allocation7 + $0x168] sm:$0xff]
    %v1031 = vld [vmem:[#allocation7 + $0x170] sm:$0xff]
    %v1032 = vld [vmem:[#allocation7 + $0x178] sm:$0xff]
    %v1033 = vld [vmem:[#allocation7 + $0x180] sm:$0xff]
    %v1034 = vld [vmem:[#allocation7 + $0x188] sm:$0xff]
    %v1035 = vld [vmem:[#allocation7 + $0x190] sm:$0xff]
    %v1036 = vld [vmem:[#allocation7 + $0x198] sm:$0xff]
    %v1037 = vld [vmem:[#allocation7 + $0x1a0] sm:$0xff]
    %v1038 = vld [vmem:[#allocation7 + $0x1a8] sm:$0xff]
    %v1039 = vld [vmem:[#allocation7 + $0x1b0] sm:$0xff]
    %v1040 = vld [vmem:[#allocation7 + $0x1b8] sm:$0xff]
    %1041 = vmatprep.subr.mxu0 0.0
    %1042 = vmatpush1.msra.mxu0 %v1025
    %1043 = vmatprep.subr.mxu0 0.0
    %1044 = vmatpush1.msra.mxu0 %v1026
    %1045 = vmatprep.subr.mxu0 0.0
    %1046 = vmatpush1.msra.mxu0 %v1027
    %1047 = vmatprep.subr.mxu0 0.0
    %1048 = vmatpush1.msra.mxu0 %v1028
    %1049 = vmatprep.subr.mxu0 0.0
    %1050 = vmatpush1.msra.mxu0 %v1029
    %1051 = vmatprep.subr.mxu0 0.0
    %1052 = vmatpush1.msra.mxu0 %v1030
    %1053 = vmatprep.subr.mxu0 0.0
    %1054 = vmatpush1.msra.mxu0 %v1031
    %1055 = vmatprep.subr.mxu0 0.0
    %1056 = vmatpush1.msra.mxu0 %v1032
    %1057 = vmatprep.subr.mxu0 0.0
    %1058 = vmatpush1.msra.mxu0 %v1033
    %1059 = vmatprep.subr.mxu0 0.0
    %1060 = vmatpush1.msra.mxu0 %v1034
    %1061 = vmatprep.subr.mxu0 0.0
    %1062 = vmatpush1.msra.mxu0 %v1035
    %1063 = vmatprep.subr.mxu0 0.0
    %1064 = vmatpush1.msra.mxu0 %v1036
    %1065 = vmatprep.subr.mxu0 0.0
    %1066 = vmatpush1.msra.mxu0 %v1037
    %1067 = vmatprep.subr.mxu0 0.0
    %1068 = vmatpush1.msra.mxu0 %v1038
    %1069 = vmatprep.subr.mxu0 0.0
    %1070 = vmatpush1.msra.mxu0 %v1039
    %1071 = vmatprep.subr.mxu0 0.0
    %1072 = vmatpush1.msra.mxu0 %v1040
    %1073 = vmatprep.subr.mxu0 0.0
    %1074 = vmatpush1.msra.mxu0 0.0
    %1075 = vmatprep.subr.mxu0 0.0
    %1076 = vmatpush1.msra.mxu0 0.0
    %1077 = vmatprep.subr.mxu0 0.0
    %1078 = vmatpush1.msra.mxu0 0.0
    %1079 = vmatprep.subr.mxu0 0.0
    %1080 = vmatpush1.msra.mxu0 0.0
    %1081 = vmatprep.subr.mxu0 0.0
    %1082 = vmatpush1.msra.mxu0 0.0
    %1083 = vmatprep.subr.mxu0 0.0
    %1084 = vmatpush1.msra.mxu0 0.0
    %1085 = vmatprep.subr.mxu0 0.0
    %1086 = vmatpush1.msra.mxu0 0.0
    %1087 = vmatprep.subr.mxu0 0.0
    %1088 = vmatpush1.msra.mxu0 0.0
    %1089 = vmatprep.subr.mxu0 0.0
    %1090 = vmatpush1.msra.mxu0 0.0
    %1091 = vmatprep.subr.mxu0 0.0
    %1092 = vmatpush1.msra.mxu0 0.0
    %1093 = vmatprep.subr.mxu0 0.0
    %1094 = vmatpush1.msra.mxu0 0.0
    %1095 = vmatprep.subr.mxu0 0.0
    %1096 = vmatpush1.msra.mxu0 0.0
    %1097 = vmatprep.subr.mxu0 0.0
    %1098 = vmatpush1.msra.mxu0 0.0
    %1099 = vmatprep.subr.mxu0 0.0
    %1100 = vmatpush1.msra.mxu0 0.0
    %1101 = vmatprep.subr.mxu0 0.0
    %1102 = vmatpush1.msra.mxu0 0.0
    %1103 = vmatprep.subr.mxu0 0.0
    %1104 = vmatpush1.msra.mxu0 0.0
    %1105 = vmatprep.mubr.f32.mxu0 0.0
    %1106 = vmatmul.mubr.f32.gmra.mrb[0].mxu0 %v1023
    %v1107 = vpop.f32.mrb[0].mxu0
    %v1108 = vadd.f32 0.0, %v1107
    %v1109 = vpop.f32.mrb[0].mxu0
    %1110 = vmatprep.mubr.f32.mxu0 0.0
    %1111 = vmatmul.mubr.f32.gmra.mrb[0].mxu0 %v1024
    %v1112 = vpop.f32.mrb[0].mxu0
    %v1113 = vadd.f32 0.0, %v1112
    %v1114 = vpop.f32.mrb[0].mxu0
    %1115 = vdwg.mxu0
    %1116 = vmatprep.subr.mxu0 0.0
    %1117 = vmatpush1.msra.mxu0 %v1007
    %1118 = vmatprep.subr.mxu0 0.0
    %1119 = vmatpush1.msra.mxu0 %v1008
    %1120 = vmatprep.subr.mxu0 0.0
    %1121 = vmatpush1.msra.mxu0 %v1009
    %1122 = vmatprep.subr.mxu0 0.0
    %1123 = vmatpush1.msra.mxu0 %v1010
    %1124 = vmatprep.subr.mxu0 0.0
    %1125 = vmatpush1.msra.mxu0 %v1011
    %1126 = vmatprep.subr.mxu0 0.0
    %1127 = vmatpush1.msra.mxu0 %v1012
    %1128 = vmatprep.subr.mxu0 0.0
    %1129 = vmatpush1.msra.mxu0 %v1013
    %1130 = vmatprep.subr.mxu0 0.0
    %1131 = vmatpush1.msra.mxu0 %v1014
    %1132 = vmatprep.subr.mxu0 0.0
    %1133 = vmatpush1.msra.mxu0 %v1015
    %1134 = vmatprep.subr.mxu0 0.0
    %1135 = vmatpush1.msra.mxu0 %v1016
    %1136 = vmatprep.subr.mxu0 0.0
    %1137 = vmatpush1.msra.mxu0 %v1017
    %1138 = vmatprep.subr.mxu0 0.0
    %1139 = vmatpush1.msra.mxu0 %v1018
    %1140 = vmatprep.subr.mxu0 0.0
    %1141 = vmatpush1.msra.mxu0 %v1019
    %1142 = vmatprep.subr.mxu0 0.0
    %1143 = vmatpush1.msra.mxu0 %v1020
    %1144 = vmatprep.subr.mxu0 0.0
    %1145 = vmatpush1.msra.mxu0 %v1021
    %1146 = vmatprep.subr.mxu0 0.0
    %1147 = vmatpush1.msra.mxu0 %v1022
    %1148 = vmatprep.subr.mxu0 0.0
    %1149 = vmatpush1.msra.mxu0 0.0
    %1150 = vmatprep.subr.mxu0 0.0
    %1151 = vmatpush1.msra.mxu0 0.0
    %1152 = vmatprep.subr.mxu0 0.0
    %1153 = vmatpush1.msra.mxu0 0.0
    %1154 = vmatprep.subr.mxu0 0.0
    %1155 = vmatpush1.msra.mxu0 0.0
    %1156 = vmatprep.subr.mxu0 0.0
    %1157 = vmatpush1.msra.mxu0 0.0
    %1158 = vmatprep.subr.mxu0 0.0
    %1159 = vmatpush1.msra.mxu0 0.0
    %1160 = vmatprep.subr.mxu0 0.0
    %1161 = vmatpush1.msra.mxu0 0.0
    %1162 = vmatprep.subr.mxu0 0.0
    %1163 = vmatpush1.msra.mxu0 0.0
    %1164 = vmatprep.subr.mxu0 0.0
    %1165 = vmatpush1.msra.mxu0 0.0
    %1166 = vmatprep.subr.mxu0 0.0
    %1167 = vmatpush1.msra.mxu0 0.0
    %1168 = vmatprep.subr.mxu0 0.0
    %1169 = vmatpush1.msra.mxu0 0.0
    %1170 = vmatprep.subr.mxu0 0.0
    %1171 = vmatpush1.msra.mxu0 0.0
    %1172 = vmatprep.subr.mxu0 0.0
    %1173 = vmatpush1.msra.mxu0 0.0
    %1174 = vmatprep.subr.mxu0 0.0
    %1175 = vmatpush1.msra.mxu0 0.0
    %1176 = vmatprep.subr.mxu0 0.0
    %1177 = vmatpush1.msra.mxu0 0.0
    %1178 = vmatprep.subr.mxu0 0.0
    %1179 = vmatpush1.msra.mxu0 0.0
    %1180 = vmatprep.mubr.f32.mxu0 0.0
    %1181 = vmatmul.mubr.f32.gmra.mrb[0].mxu0 %v1005
    %v1182 = vpop.f32.mrb[0].mxu0
    %v1183 = vadd.f32 %v1108, %v1182
    %v1184 = vpop.f32.mrb[0].mxu0
    %1185 = vmatprep.mubr.f32.mxu0 0.0
    %1186 = vmatmul.mubr.f32.gmra.mrb[0].mxu0 %v1006
    %v1187 = vpop.f32.mrb[0].mxu0
    %v1188 = vadd.f32 %v1113, %v1187
    %v1189 = vpop.f32.mrb[0].mxu0
    %1190 = vdwg.mxu0
    %v1191 = vld [vmem:[#allocation3 + $0x2] sm:$0xff]
    %v1192 = vld [vmem:[#allocation3 + $0x12] sm:$0xff]
    %v1193 = vld [vmem:[#allocation7 + $0x1c0] sm:$0xff]
    %v1194 = vld [vmem:[#allocation7 + $0x1c8] sm:$0xff]
    %v1195 = vld [vmem:[#allocation7 + $0x1d0] sm:$0xff]
    %v1196 = vld [vmem:[#allocation7 + $0x1d8] sm:$0xff]
    %v1197 = vld [vmem:[#allocation7 + $0x1e0] sm:$0xff]
    %v1198 = vld [vmem:[#allocation7 + $0x1e8] sm:$0xff]
    %v1199 = vld [vmem:[#allocation7 + $0x1f0] sm:$0xff]
    %v1200 = vld [vmem:[#allocation7 + $0x1f8] sm:$0xff]
    %v1201 = vld [vmem:[#allocation7 + $0x200] sm:$0xff]
    %v1202 = vld [vmem:[#allocation7 + $0x208] sm:$0xff]
    %v1203 = vld [vmem:[#allocation7 + $0x210] sm:$0xff]
    %v1204 = vld [vmem:[#allocation7 + $0x218] sm:$0xff]
    %v1205 = vld [vmem:[#allocation7 + $0x220] sm:$0xff]
    %v1206 = vld [vmem:[#allocation7 + $0x228] sm:$0xff]
    %v1207 = vld [vmem:[#allocation7 + $0x230] sm:$0xff]
    %v1208 = vld [vmem:[#allocation7 + $0x238] sm:$0xff]
    %1209 = vmatprep.subr.mxu0 0.0
    %1210 = vmatpush1.msra.mxu0 %v1193
    %1211 = vmatprep.subr.mxu0 0.0
    %1212 = vmatpush1.msra.mxu0 %v1194
    %1213 = vmatprep.subr.mxu0 0.0
    %1214 = vmatpush1.msra.mxu0 %v1195
    %1215 = vmatprep.subr.mxu0 0.0
    %1216 = vmatpush1.msra.mxu0 %v1196
    %1217 = vmatprep.subr.mxu0 0.0
    %1218 = vmatpush1.msra.mxu0 %v1197
    %1219 = vmatprep.subr.mxu0 0.0
    %1220 = vmatpush1.msra.mxu0 %v1198
    %1221 = vmatprep.subr.mxu0 0.0
    %1222 = vmatpush1.msra.mxu0 %v1199
    %1223 = vmatprep.subr.mxu0 0.0
    %1224 = vmatpush1.msra.mxu0 %v1200
    %1225 = vmatprep.subr.mxu0 0.0
    %1226 = vmatpush1.msra.mxu0 %v1201
    %1227 = vmatprep.subr.mxu0 0.0
    %1228 = vmatpush1.msra.mxu0 %v1202
    %1229 = vmatprep.subr.mxu0 0.0
    %1230 = vmatpush1.msra.mxu0 %v1203
    %1231 = vmatprep.subr.mxu0 0.0
    %1232 = vmatpush1.msra.mxu0 %v1204
    %1233 = vmatprep.subr.mxu0 0.0
    %1234 = vmatpush1.msra.mxu0 %v1205
    %1235 = vmatprep.subr.mxu0 0.0
    %1236 = vmatpush1.msra.mxu0 %v1206
    %1237 = vmatprep.subr.mxu0 0.0
    %1238 = vmatpush1.msra.mxu0 %v1207
    %1239 = vmatprep.subr.mxu0 0.0
    %1240 = vmatpush1.msra.mxu0 %v1208
    %1241 = vmatprep.subr.mxu0 0.0
    %1242 = vmatpush1.msra.mxu0 0.0
    %1243 = vmatprep.subr.mxu0 0.0
    %1244 = vmatpush1.msra.mxu0 0.0
    %1245 = vmatprep.subr.mxu0 0.0
    %1246 = vmatpush1.msra.mxu0 0.0
    %1247 = vmatprep.subr.mxu0 0.0
    %1248 = vmatpush1.msra.mxu0 0.0
    %1249 = vmatprep.subr.mxu0 0.0
    %1250 = vmatpush1.msra.mxu0 0.0
    %1251 = vmatprep.subr.mxu0 0.0
    %1252 = vmatpush1.msra.mxu0 0.0
    %1253 = vmatprep.subr.mxu0 0.0
    %1254 = vmatpush1.msra.mxu0 0.0
    %1255 = vmatprep.subr.mxu0 0.0
    %1256 = vmatpush1.msra.mxu0 0.0
    %1257 = vmatprep.subr.mxu0 0.0
    %1258 = vmatpush1.msra.mxu0 0.0
    %1259 = vmatprep.subr.mxu0 0.0
    %1260 = vmatpush1.msra.mxu0 0.0
    %1261 = vmatprep.subr.mxu0 0.0
    %1262 = vmatpush1.msra.mxu0 0.0
    %1263 = vmatprep.subr.mxu0 0.0
    %1264 = vmatpush1.msra.mxu0 0.0
    %1265 = vmatprep.subr.mxu0 0.0
    %1266 = vmatpush1.msra.mxu0 0.0
    %1267 = vmatprep.subr.mxu0 0.0
    %1268 = vmatpush1.msra.mxu0 0.0
    %1269 = vmatprep.subr.mxu0 0.0
    %1270 = vmatpush1.msra.mxu0 0.0
    %1271 = vmatprep.subr.mxu0 0.0
    %1272 = vmatpush1.msra.mxu0 0.0
    %1273 = vmatprep.mubr.f32.mxu0 0.0
    %1274 = vmatmul.mubr.f32.gmra.mrb[0].mxu0 %v1191
    %v1275 = vpop.f32.mrb[0].mxu0
    %v1276 = vadd.f32 0.0, %v1275
    %v1277 = vpop.f32.mrb[0].mxu0
    %1278 = vmatprep.mubr.f32.mxu0 0.0
    %1279 = vmatmul.mubr.f32.gmra.mrb[0].mxu0 %v1192
    %v1280 = vpop.f32.mrb[0].mxu0
    %v1281 = vadd.f32 0.0, %v1280
    %v1282 = vpop.f32.mrb[0].mxu0
    %1283 = vdwg.mxu0
    %v1284 = vadd.f32 %v1183, %v1276
    %v1285 = vadd.f32 %v1188, %v1281
    %v1286 = vld [vmem:[#allocation7 + $0x541] sm:$0x1]
    %v1287 = vlaneseq
    %v1288 = vshrl.u32 %v1287, 7
    %v1289 = vsub.s32 0, %v1288
    %v1290 = vrot.slane %v1286, %v1289
    %v1291 = vadd.f32 %v1284, %v1290
    %v1292 = vadd.f32 %v1285, %v1290
    %v1293 = vmax.f32 %v1291, 0.0
    %v1294 = vmax.f32 %v1292, 0.0
    %v1297 = vcombine.high %v1293, %v1293
    %v1299 = vunpack.c.l.s4 1983009808
    %v1300 = vunpack.c.0.s8 %v1299
    %v1301 = vlaneseq
    %v1302 = vshrl.u32 %v1301, 7
    %v1303 = vsub.s32 %v1300, %v1302
    %v1304 = vrot.slane %v1293, %v1303
    %v1306 = vunpack.c.l.s4 1983009808
    %v1307 = vunpack.c.0.s8 %v1306
    %v1308 = vlaneseq
    %v1309 = vshrl.u32 %v1308, 7
    %v1310 = vsub.s32 %v1307, %v1309
    %v1311 = vrot.slane %v1297, %v1310
    %v1312 = vcombine.high %v1304, %v1304
    %v1313 = vcombine.high %v1311, %v1311
    %v1314 = vcombine.high %v1294, %v1294
    %v1316 = vunpack.c.l.s4 1983009808
    %v1317 = vunpack.c.0.s8 %v1316
    %v1318 = vlaneseq
    %v1319 = vshrl.u32 %v1318, 7
    %v1320 = vsub.s32 %v1317, %v1319
    %v1321 = vrot.slane %v1294, %v1320
    %v1323 = vunpack.c.l.s4 1983009808
    %v1324 = vunpack.c.0.s8 %v1323
    %v1325 = vlaneseq
    %v1326 = vshrl.u32 %v1325, 7
    %v1327 = vsub.s32 %v1324, %v1326
    %v1328 = vrot.slane %v1314, %v1327
    %v1329 = vcombine.high %v1321, %v1321
    %v1330 = vcombine.high %v1328, %v1328
    %v1339 = vrot.slane %v1304, 7
    %v1340 = vrot.slane %v1339, 2
    %v1341 = vrot.slane %v1312, 7
    %v1342 = vrot.slane %v1341, 2
    %v1343 = vrot.slane %v1311, 7
    %v1344 = vrot.slane %v1343, 2
    %v1345 = vrot.slane %v1313, 7
    %v1346 = vrot.slane %v1345, 2
    %v1347 = vrot.slane %v1321, 7
    %v1348 = vrot.slane %v1347, 2
    %v1349 = vrot.slane %v1329, 7
    %v1350 = vrot.slane %v1349, 2
    %v1351 = vrot.slane %v1328, 7
    %v1352 = vrot.slane %v1351, 2
    %v1353 = vrot.slane %v1330, 7
    %v1354 = vrot.slane %v1353, 2
    %v1363 = vmax.f32 %v1304, %v1340
    %v1364 = vmax.f32 %v1312, %v1342
    %v1365 = vmax.f32 %v1311, %v1344
    %v1366 = vmax.f32 %v1313, %v1346
    %v1367 = vmax.f32 %v1321, %v1348
    %v1368 = vmax.f32 %v1329, %v1350
    %v1369 = vmax.f32 %v1328, %v1352
    %v1370 = vmax.f32 %v1330, %v1354
    %v1379 = vlaneseq
    %v1380 = vshrl.u32 %v1379, 7
    %v1381 = vsub.s32 0, %v1380
    %v1382 = vrot.slane %v1363, %v1381
    %v1383 = vlaneseq
    %v1384 = vshrl.u32 %v1383, 7
    %v1385 = vsub.s32 0, %v1384
    %v1386 = vrot.slane %v1364, %v1385
    %v1387 = vlaneseq
    %v1388 = vshrl.u32 %v1387, 7
    %v1389 = vsub.s32 0, %v1388
    %v1390 = vrot.slane %v1365, %v1389
    %v1391 = vlaneseq
    %v1392 = vshrl.u32 %v1391, 7
    %v1393 = vsub.s32 0, %v1392
    %v1394 = vrot.slane %v1366, %v1393
    %v1395 = vlaneseq
    %v1396 = vshrl.u32 %v1395, 7
    %v1397 = vsub.s32 0, %v1396
    %v1398 = vrot.slane %v1367, %v1397
    %v1399 = vlaneseq
    %v1400 = vshrl.u32 %v1399, 7
    %v1401 = vsub.s32 0, %v1400
    %v1402 = vrot.slane %v1368, %v1401
    %v1403 = vlaneseq
    %v1404 = vshrl.u32 %v1403, 7
    %v1405 = vsub.s32 0, %v1404
    %v1406 = vrot.slane %v1369, %v1405
    %v1407 = vlaneseq
    %v1408 = vshrl.u32 %v1407, 7
    %v1409 = vsub.s32 0, %v1408
    %v1410 = vrot.slane %v1370, %v1409
    %v1411 = vsel %vm709, %v1386, %v1382
    %v1412 = vsel %vm711, %v1390, %v1411
    %v1413 = vsel %vm713, %v1394, %v1412
    %v1414 = vsel %vm715, %v1398, %v1413
    %v1415 = vsel %vm717, %v1402, %v1414
    %v1416 = vsel %vm719, %v1406, %v1415
    %v1417 = vsel %vm721, %v1410, %v1416
    %1418 = vrot.lane.b32.xlu0 %v1417, 112
    %v1419 = vpop.permute.xlu0 %1418
    %v1422 = vcombine.high %v1419, %v1419
    %v1424 = vunpack.c.l.s4 1983009808
    %v1425 = vunpack.c.0.s8 %v1424
    %v1426 = vlaneseq
    %v1427 = vshrl.u32 %v1426, 7
    %v1428 = vsub.s32 %v1425, %v1427
    %v1429 = vrot.slane %v1419, %v1428
    %v1431 = vunpack.c.l.s4 1983009808
    %v1432 = vunpack.c.0.s8 %v1431
    %v1433 = vlaneseq
    %v1434 = vshrl.u32 %v1433, 7
    %v1435 = vsub.s32 %v1432, %v1434
    %v1436 = vrot.slane %v1422, %v1435
    %v1437 = vcombine.high %v1429, %v1429
    %v1438 = vcombine.high %v1436, %v1436
    %v1439 = vrot.slane %v1429, 1
    %v1440 = vrot.slane %v1437, 1
    %v1441 = vrot.slane %v1436, 1
    %v1442 = vrot.slane %v1438, 1
    %v1451 = vmax.f32 %v1363, %v1429
    %v1452 = vmax.f32 %v1364, %v1439
    %v1453 = vmax.f32 %v1365, %v1437
    %v1454 = vmax.f32 %v1366, %v1440
    %v1455 = vmax.f32 %v1367, %v1436
    %v1456 = vmax.f32 %v1368, %v1441
    %v1457 = vmax.f32 %v1369, %v1438
    %v1458 = vmax.f32 %v1370, %v1442
    %v1459 = vld [vmem:[#allocation7 + $0x542] sm:$0x1]
    %v1460 = vld [vmem:[#allocation7 + $0x2c0] sm:$0xff]
    %v1461 = vld [vmem:[#allocation7 + $0x2c8] sm:$0xff]
    %v1462 = vld [vmem:[#allocation7 + $0x2d0] sm:$0xff]
    %v1463 = vld [vmem:[#allocation7 + $0x2d8] sm:$0xff]
    %v1464 = vld [vmem:[#allocation7 + $0x2e0] sm:$0xff]
    %v1465 = vld [vmem:[#allocation7 + $0x2e8] sm:$0xff]
    %v1466 = vld [vmem:[#allocation7 + $0x2f0] sm:$0xff]
    %v1467 = vld [vmem:[#allocation7 + $0x2f8] sm:$0xff]
    %v1468 = vld [vmem:[#allocation7 + $0x300] sm:$0xff]
    %v1469 = vld [vmem:[#allocation7 + $0x308] sm:$0xff]
    %v1470 = vld [vmem:[#allocation7 + $0x310] sm:$0xff]
    %v1471 = vld [vmem:[#allocation7 + $0x318] sm:$0xff]
    %v1472 = vld [vmem:[#allocation7 + $0x320] sm:$0xff]
    %v1473 = vld [vmem:[#allocation7 + $0x328] sm:$0xff]
    %v1474 = vld [vmem:[#allocation7 + $0x330] sm:$0xff]
    %v1475 = vld [vmem:[#allocation7 + $0x338] sm:$0xff]
    %v1478 = vlaneseq
    %v1479 = vshrl.u32 %v1478, 7
    %v1480 = vsub.s32 0, %v1479
    %v1481 = vrot.slane %v1451, %v1480
    %v1482 = vlaneseq
    %v1483 = vshrl.u32 %v1482, 7
    %v1484 = vsub.s32 0, %v1483
    %v1485 = vrot.slane %v1455, %v1484
    %v1486 = vsel %vm709, %v1485, %v1481
    %1488 = vmatprep.subr.mxu0 0.0
    %1489 = vmatpush1.msra.mxu0 %v1460
    %1490 = vmatprep.subr.mxu0 0.0
    %1491 = vmatpush1.msra.mxu0 %v1461
    %1492 = vmatprep.subr.mxu0 0.0
    %1493 = vmatpush1.msra.mxu0 %v1462
    %1494 = vmatprep.subr.mxu0 0.0
    %1495 = vmatpush1.msra.mxu0 %v1463
    %1496 = vmatprep.subr.mxu0 0.0
    %1497 = vmatpush1.msra.mxu0 %v1464
    %1498 = vmatprep.subr.mxu0 0.0
    %1499 = vmatpush1.msra.mxu0 %v1465
    %1500 = vmatprep.subr.mxu0 0.0
    %1501 = vmatpush1.msra.mxu0 %v1466
    %1502 = vmatprep.subr.mxu0 0.0
    %1503 = vmatpush1.msra.mxu0 %v1467
    %1504 = vmatprep.subr.mxu0 0.0
    %1505 = vmatpush1.msra.mxu0 %v1468
    %1506 = vmatprep.subr.mxu0 0.0
    %1507 = vmatpush1.msra.mxu0 %v1469
    %1508 = vmatprep.subr.mxu0 0.0
    %1509 = vmatpush1.msra.mxu0 %v1470
    %1510 = vmatprep.subr.mxu0 0.0
    %1511 = vmatpush1.msra.mxu0 %v1471
    %1512 = vmatprep.subr.mxu0 0.0
    %1513 = vmatpush1.msra.mxu0 %v1472
    %1514 = vmatprep.subr.mxu0 0.0
    %1515 = vmatpush1.msra.mxu0 %v1473
    %1516 = vmatprep.subr.mxu0 0.0
    %1517 = vmatpush1.msra.mxu0 %v1474
    %1518 = vmatprep.subr.mxu0 0.0
    %1519 = vmatpush1.msra.mxu0 %v1475
    %1520 = vmatprep.subr.mxu0 0.0
    %1521 = vmatpush1.msra.mxu0 0.0
    %1522 = vmatprep.subr.mxu0 0.0
    %1523 = vmatpush1.msra.mxu0 0.0
    %1524 = vmatprep.subr.mxu0 0.0
    %1525 = vmatpush1.msra.mxu0 0.0
    %1526 = vmatprep.subr.mxu0 0.0
    %1527 = vmatpush1.msra.mxu0 0.0
    %1528 = vmatprep.subr.mxu0 0.0
    %1529 = vmatpush1.msra.mxu0 0.0
    %1530 = vmatprep.subr.mxu0 0.0
    %1531 = vmatpush1.msra.mxu0 0.0
    %1532 = vmatprep.subr.mxu0 0.0
    %1533 = vmatpush1.msra.mxu0 0.0
    %1534 = vmatprep.subr.mxu0 0.0
    %1535 = vmatpush1.msra.mxu0 0.0
    %1536 = vmatprep.subr.mxu0 0.0
    %1537 = vmatpush1.msra.mxu0 0.0
    %1538 = vmatprep.subr.mxu0 0.0
    %1539 = vmatpush1.msra.mxu0 0.0
    %1540 = vmatprep.subr.mxu0 0.0
    %1541 = vmatpush1.msra.mxu0 0.0
    %1542 = vmatprep.subr.mxu0 0.0
    %1543 = vmatpush1.msra.mxu0 0.0
    %1544 = vmatprep.subr.mxu0 0.0
    %1545 = vmatpush1.msra.mxu0 0.0
    %1546 = vmatprep.subr.mxu0 0.0
    %1547 = vmatpush1.msra.mxu0 0.0
    %1548 = vmatprep.subr.mxu0 0.0
    %1549 = vmatpush1.msra.mxu0 0.0
    %1550 = vmatprep.subr.mxu0 0.0
    %1551 = vmatpush1.msra.mxu0 0.0
    %1552 = vmatprep.mubr.f32.mxu0 0.0
    %1553 = vmatmul.mubr.f32.gmra.mrb[0].mxu0 %v1486
    %v1554 = vpop.f32.mrb[0].mxu0
    %v1555 = vadd.f32 0.0, %v1554
    %v1556 = vpop.f32.mrb[0].mxu0
    %1557 = vdwg.mxu0
    %v1558 = vlaneseq
    %v1559 = vshrl.u32 %v1558, 7
    %v1560 = vsub.s32 0, %v1559
    %v1561 = vrot.slane %v1459, %v1560
    %v1562 = vadd.f32 %v1561, %v1555
    %v1563 = vld [vmem:[#allocation7 + $0x340] sm:$0xff]
    %v1564 = vld [vmem:[#allocation7 + $0x348] sm:$0xff]
    %v1565 = vld [vmem:[#allocation7 + $0x350] sm:$0xff]
    %v1566 = vld [vmem:[#allocation7 + $0x358] sm:$0xff]
    %v1567 = vld [vmem:[#allocation7 + $0x360] sm:$0xff]
    %v1568 = vld [vmem:[#allocation7 + $0x368] sm:$0xff]
    %v1569 = vld [vmem:[#allocation7 + $0x370] sm:$0xff]
    %v1570 = vld [vmem:[#allocation7 + $0x378] sm:$0xff]
    %v1571 = vld [vmem:[#allocation7 + $0x380] sm:$0xff]
    %v1572 = vld [vmem:[#allocation7 + $0x388] sm:$0xff]
    %v1573 = vld [vmem:[#allocation7 + $0x390] sm:$0xff]
    %v1574 = vld [vmem:[#allocation7 + $0x398] sm:$0xff]
    %v1575 = vld [vmem:[#allocation7 + $0x3a0] sm:$0xff]
    %v1576 = vld [vmem:[#allocation7 + $0x3a8] sm:$0xff]
    %v1577 = vld [vmem:[#allocation7 + $0x3b0] sm:$0xff]
    %v1578 = vld [vmem:[#allocation7 + $0x3b8] sm:$0xff]
    %v1581 = vlaneseq
    %v1582 = vshrl.u32 %v1581, 7
    %v1583 = vsub.s32 0, %v1582
    %v1584 = vrot.slane %v1452, %v1583
    %v1585 = vlaneseq
    %v1586 = vshrl.u32 %v1585, 7
    %v1587 = vsub.s32 0, %v1586
    %v1588 = vrot.slane %v1456, %v1587
    %v1589 = vsel %vm709, %v1588, %v1584
    %1591 = vmatprep.subr.mxu0 0.0
    %1592 = vmatpush1.msra.mxu0 %v1563
    %1593 = vmatprep.subr.mxu0 0.0
    %1594 = vmatpush1.msra.mxu0 %v1564
    %1595 = vmatprep.subr.mxu0 0.0
    %1596 = vmatpush1.msra.mxu0 %v1565
    %1597 = vmatprep.subr.mxu0 0.0
    %1598 = vmatpush1.msra.mxu0 %v1566
    %1599 = vmatprep.subr.mxu0 0.0
    %1600 = vmatpush1.msra.mxu0 %v1567
    %1601 = vmatprep.subr.mxu0 0.0
    %1602 = vmatpush1.msra.mxu0 %v1568
    %1603 = vmatprep.subr.mxu0 0.0
    %1604 = vmatpush1.msra.mxu0 %v1569
    %1605 = vmatprep.subr.mxu0 0.0
    %1606 = vmatpush1.msra.mxu0 %v1570
    %1607 = vmatprep.subr.mxu0 0.0
    %1608 = vmatpush1.msra.mxu0 %v1571
    %1609 = vmatprep.subr.mxu0 0.0
    %1610 = vmatpush1.msra.mxu0 %v1572
    %1611 = vmatprep.subr.mxu0 0.0
    %1612 = vmatpush1.msra.mxu0 %v1573
    %1613 = vmatprep.subr.mxu0 0.0
    %1614 = vmatpush1.msra.mxu0 %v1574
    %1615 = vmatprep.subr.mxu0 0.0
    %1616 = vmatpush1.msra.mxu0 %v1575
    %1617 = vmatprep.subr.mxu0 0.0
    %1618 = vmatpush1.msra.mxu0 %v1576
    %1619 = vmatprep.subr.mxu0 0.0
    %1620 = vmatpush1.msra.mxu0 %v1577
    %1621 = vmatprep.subr.mxu0 0.0
    %1622 = vmatpush1.msra.mxu0 %v1578
    %1623 = vmatprep.subr.mxu0 0.0
    %1624 = vmatpush1.msra.mxu0 0.0
    %1625 = vmatprep.subr.mxu0 0.0
    %1626 = vmatpush1.msra.mxu0 0.0
    %1627 = vmatprep.subr.mxu0 0.0
    %1628 = vmatpush1.msra.mxu0 0.0
    %1629 = vmatprep.subr.mxu0 0.0
    %1630 = vmatpush1.msra.mxu0 0.0
    %1631 = vmatprep.subr.mxu0 0.0
    %1632 = vmatpush1.msra.mxu0 0.0
    %1633 = vmatprep.subr.mxu0 0.0
    %1634 = vmatpush1.msra.mxu0 0.0
    %1635 = vmatprep.subr.mxu0 0.0
    %1636 = vmatpush1.msra.mxu0 0.0
    %1637 = vmatprep.subr.mxu0 0.0
    %1638 = vmatpush1.msra.mxu0 0.0
    %1639 = vmatprep.subr.mxu0 0.0
    %1640 = vmatpush1.msra.mxu0 0.0
    %1641 = vmatprep.subr.mxu0 0.0
    %1642 = vmatpush1.msra.mxu0 0.0
    %1643 = vmatprep.subr.mxu0 0.0
    %1644 = vmatpush1.msra.mxu0 0.0
    %1645 = vmatprep.subr.mxu0 0.0
    %1646 = vmatpush1.msra.mxu0 0.0
    %1647 = vmatprep.subr.mxu0 0.0
    %1648 = vmatpush1.msra.mxu0 0.0
    %1649 = vmatprep.subr.mxu0 0.0
    %1650 = vmatpush1.msra.mxu0 0.0
    %1651 = vmatprep.subr.mxu0 0.0
    %1652 = vmatpush1.msra.mxu0 0.0
    %1653 = vmatprep.subr.mxu0 0.0
    %1654 = vmatpush1.msra.mxu0 0.0
    %1655 = vmatprep.mubr.f32.mxu0 0.0
    %1656 = vmatmul.mubr.f32.gmra.mrb[0].mxu0 %v1589
    %v1657 = vpop.f32.mrb[0].mxu0
    %v1658 = vadd.f32 0.0, %v1657
    %v1659 = vpop.f32.mrb[0].mxu0
    %1660 = vdwg.mxu0
    %v1661 = vadd.f32 %v1562, %v1658
    %v1662 = vld [vmem:[#allocation7 + $0x3c0] sm:$0xff]
    %v1663 = vld [vmem:[#allocation7 + $0x3c8] sm:$0xff]
    %v1664 = vld [vmem:[#allocation7 + $0x3d0] sm:$0xff]
    %v1665 = vld [vmem:[#allocation7 + $0x3d8] sm:$0xff]
    %v1666 = vld [vmem:[#allocation7 + $0x3e0] sm:$0xff]
    %v1667 = vld [vmem:[#allocation7 + $0x3e8] sm:$0xff]
    %v1668 = vld [vmem:[#allocation7 + $0x3f0] sm:$0xff]
    %v1669 = vld [vmem:[#allocation7 + $0x3f8] sm:$0xff]
    %v1670 = vld [vmem:[#allocation7 + $0x400] sm:$0xff]
    %v1671 = vld [vmem:[#allocation7 + $0x408] sm:$0xff]
    %v1672 = vld [vmem:[#allocation7 + $0x410] sm:$0xff]
    %v1673 = vld [vmem:[#allocation7 + $0x418] sm:$0xff]
    %v1674 = vld [vmem:[#allocation7 + $0x420] sm:$0xff]
    %v1675 = vld [vmem:[#allocation7 + $0x428] sm:$0xff]
    %v1676 = vld [vmem:[#allocation7 + $0x430] sm:$0xff]
    %v1677 = vld [vmem:[#allocation7 + $0x438] sm:$0xff]
    %v1680 = vlaneseq
    %v1681 = vshrl.u32 %v1680, 7
    %v1682 = vsub.s32 0, %v1681
    %v1683 = vrot.slane %v1453, %v1682
    %v1684 = vlaneseq
    %v1685 = vshrl.u32 %v1684, 7
    %v1686 = vsub.s32 0, %v1685
    %v1687 = vrot.slane %v1457, %v1686
    %v1688 = vsel %vm709, %v1687, %v1683
    %1690 = vmatprep.subr.mxu0 0.0
    %1691 = vmatpush1.msra.mxu0 %v1662
    %1692 = vmatprep.subr.mxu0 0.0
    %1693 = vmatpush1.msra.mxu0 %v1663
    %1694 = vmatprep.subr.mxu0 0.0
    %1695 = vmatpush1.msra.mxu0 %v1664
    %1696 = vmatprep.subr.mxu0 0.0
    %1697 = vmatpush1.msra.mxu0 %v1665
    %1698 = vmatprep.subr.mxu0 0.0
    %1699 = vmatpush1.msra.mxu0 %v1666
    %1700 = vmatprep.subr.mxu0 0.0
    %1701 = vmatpush1.msra.mxu0 %v1667
    %1702 = vmatprep.subr.mxu0 0.0
    %1703 = vmatpush1.msra.mxu0 %v1668
    %1704 = vmatprep.subr.mxu0 0.0
    %1705 = vmatpush1.msra.mxu0 %v1669
    %1706 = vmatprep.subr.mxu0 0.0
    %1707 = vmatpush1.msra.mxu0 %v1670
    %1708 = vmatprep.subr.mxu0 0.0
    %1709 = vmatpush1.msra.mxu0 %v1671
    %1710 = vmatprep.subr.mxu0 0.0
    %1711 = vmatpush1.msra.mxu0 %v1672
    %1712 = vmatprep.subr.mxu0 0.0
    %1713 = vmatpush1.msra.mxu0 %v1673
    %1714 = vmatprep.subr.mxu0 0.0
    %1715 = vmatpush1.msra.mxu0 %v1674
    %1716 = vmatprep.subr.mxu0 0.0
    %1717 = vmatpush1.msra.mxu0 %v1675
    %1718 = vmatprep.subr.mxu0 0.0
    %1719 = vmatpush1.msra.mxu0 %v1676
    %1720 = vmatprep.subr.mxu0 0.0
    %1721 = vmatpush1.msra.mxu0 %v1677
    %1722 = vmatprep.subr.mxu0 0.0
    %1723 = vmatpush1.msra.mxu0 0.0
    %1724 = vmatprep.subr.mxu0 0.0
    %1725 = vmatpush1.msra.mxu0 0.0
    %1726 = vmatprep.subr.mxu0 0.0
    %1727 = vmatpush1.msra.mxu0 0.0
    %1728 = vmatprep.subr.mxu0 0.0
    %1729 = vmatpush1.msra.mxu0 0.0
    %1730 = vmatprep.subr.mxu0 0.0
    %1731 = vmatpush1.msra.mxu0 0.0
    %1732 = vmatprep.subr.mxu0 0.0
    %1733 = vmatpush1.msra.mxu0 0.0
    %1734 = vmatprep.subr.mxu0 0.0
    %1735 = vmatpush1.msra.mxu0 0.0
    %1736 = vmatprep.subr.mxu0 0.0
    %1737 = vmatpush1.msra.mxu0 0.0
    %1738 = vmatprep.subr.mxu0 0.0
    %1739 = vmatpush1.msra.mxu0 0.0
    %1740 = vmatprep.subr.mxu0 0.0
    %1741 = vmatpush1.msra.mxu0 0.0
    %1742 = vmatprep.subr.mxu0 0.0
    %1743 = vmatpush1.msra.mxu0 0.0
    %1744 = vmatprep.subr.mxu0 0.0
    %1745 = vmatpush1.msra.mxu0 0.0
    %1746 = vmatprep.subr.mxu0 0.0
    %1747 = vmatpush1.msra.mxu0 0.0
    %1748 = vmatprep.subr.mxu0 0.0
    %1749 = vmatpush1.msra.mxu0 0.0
    %1750 = vmatprep.subr.mxu0 0.0
    %1751 = vmatpush1.msra.mxu0 0.0
    %1752 = vmatprep.subr.mxu0 0.0
    %1753 = vmatpush1.msra.mxu0 0.0
    %1754 = vmatprep.mubr.f32.mxu0 0.0
    %1755 = vmatmul.mubr.f32.gmra.mrb[0].mxu0 %v1688
    %v1756 = vpop.f32.mrb[0].mxu0
    %v1757 = vadd.f32 0.0, %v1756
    %v1758 = vpop.f32.mrb[0].mxu0
    %1759 = vdwg.mxu0
    %v1760 = vadd.f32 %v1661, %v1757
    %v1761 = vld [vmem:[#allocation7 + $0x440] sm:$0xff]
    %v1762 = vld [vmem:[#allocation7 + $0x448] sm:$0xff]
    %v1763 = vld [vmem:[#allocation7 + $0x450] sm:$0xff]
    %v1764 = vld [vmem:[#allocation7 + $0x458] sm:$0xff]
    %v1765 = vld [vmem:[#allocation7 + $0x460] sm:$0xff]
    %v1766 = vld [vmem:[#allocation7 + $0x468] sm:$0xff]
    %v1767 = vld [vmem:[#allocation7 + $0x470] sm:$0xff]
    %v1768 = vld [vmem:[#allocation7 + $0x478] sm:$0xff]
    %v1769 = vld [vmem:[#allocation7 + $0x480] sm:$0xff]
    %v1770 = vld [vmem:[#allocation7 + $0x488] sm:$0xff]
    %v1771 = vld [vmem:[#allocation7 + $0x490] sm:$0xff]
    %v1772 = vld [vmem:[#allocation7 + $0x498] sm:$0xff]
    %v1773 = vld [vmem:[#allocation7 + $0x4a0] sm:$0xff]
    %v1774 = vld [vmem:[#allocation7 + $0x4a8] sm:$0xff]
    %v1775 = vld [vmem:[#allocation7 + $0x4b0] sm:$0xff]
    %v1776 = vld [vmem:[#allocation7 + $0x4b8] sm:$0xff]
    %v1779 = vlaneseq
    %v1780 = vshrl.u32 %v1779, 7
    %v1781 = vsub.s32 0, %v1780
    %v1782 = vrot.slane %v1454, %v1781
    %v1783 = vlaneseq
    %v1784 = vshrl.u32 %v1783, 7
    %v1785 = vsub.s32 0, %v1784
    %v1786 = vrot.slane %v1458, %v1785
    %v1787 = vsel %vm709, %v1786, %v1782
    %1789 = vmatprep.subr.mxu0 0.0
    %1790 = vmatpush1.msra.mxu0 %v1761
    %1791 = vmatprep.subr.mxu0 0.0
    %1792 = vmatpush1.msra.mxu0 %v1762
    %1793 = vmatprep.subr.mxu0 0.0
    %1794 = vmatpush1.msra.mxu0 %v1763
    %1795 = vmatprep.subr.mxu0 0.0
    %1796 = vmatpush1.msra.mxu0 %v1764
    %1797 = vmatprep.subr.mxu0 0.0
    %1798 = vmatpush1.msra.mxu0 %v1765
    %1799 = vmatprep.subr.mxu0 0.0
    %1800 = vmatpush1.msra.mxu0 %v1766
    %1801 = vmatprep.subr.mxu0 0.0
    %1802 = vmatpush1.msra.mxu0 %v1767
    %1803 = vmatprep.subr.mxu0 0.0
    %1804 = vmatpush1.msra.mxu0 %v1768
    %1805 = vmatprep.subr.mxu0 0.0
    %1806 = vmatpush1.msra.mxu0 %v1769
    %1807 = vmatprep.subr.mxu0 0.0
    %1808 = vmatpush1.msra.mxu0 %v1770
    %1809 = vmatprep.subr.mxu0 0.0
    %1810 = vmatpush1.msra.mxu0 %v1771
    %1811 = vmatprep.subr.mxu0 0.0
    %1812 = vmatpush1.msra.mxu0 %v1772
    %1813 = vmatprep.subr.mxu0 0.0
    %1814 = vmatpush1.msra.mxu0 %v1773
    %1815 = vmatprep.subr.mxu0 0.0
    %1816 = vmatpush1.msra.mxu0 %v1774
    %1817 = vmatprep.subr.mxu0 0.0
    %1818 = vmatpush1.msra.mxu0 %v1775
    %1819 = vmatprep.subr.mxu0 0.0
    %1820 = vmatpush1.msra.mxu0 %v1776
    %1821 = vmatprep.subr.mxu0 0.0
    %1822 = vmatpush1.msra.mxu0 0.0
    %1823 = vmatprep.subr.mxu0 0.0
    %1824 = vmatpush1.msra.mxu0 0.0
    %1825 = vmatprep.subr.mxu0 0.0
    %1826 = vmatpush1.msra.mxu0 0.0
    %1827 = vmatprep.subr.mxu0 0.0
    %1828 = vmatpush1.msra.mxu0 0.0
    %1829 = vmatprep.subr.mxu0 0.0
    %1830 = vmatpush1.msra.mxu0 0.0
    %1831 = vmatprep.subr.mxu0 0.0
    %1832 = vmatpush1.msra.mxu0 0.0
    %1833 = vmatprep.subr.mxu0 0.0
    %1834 = vmatpush1.msra.mxu0 0.0
    %1835 = vmatprep.subr.mxu0 0.0
    %1836 = vmatpush1.msra.mxu0 0.0
    %1837 = vmatprep.subr.mxu0 0.0
    %1838 = vmatpush1.msra.mxu0 0.0
    %1839 = vmatprep.subr.mxu0 0.0
    %1840 = vmatpush1.msra.mxu0 0.0
    %1841 = vmatprep.subr.mxu0 0.0
    %1842 = vmatpush1.msra.mxu0 0.0
    %1843 = vmatprep.subr.mxu0 0.0
    %1844 = vmatpush1.msra.mxu0 0.0
    %1845 = vmatprep.subr.mxu0 0.0
    %1846 = vmatpush1.msra.mxu0 0.0
    %1847 = vmatprep.subr.mxu0 0.0
    %1848 = vmatpush1.msra.mxu0 0.0
    %1849 = vmatprep.subr.mxu0 0.0
    %1850 = vmatpush1.msra.mxu0 0.0
    %1851 = vmatprep.subr.mxu0 0.0
    %1852 = vmatpush1.msra.mxu0 0.0
    %1853 = vmatprep.mubr.f32.mxu0 0.0
    %1854 = vmatmul.mubr.f32.gmra.mrb[0].mxu0 %v1787
    %v1855 = vpop.f32.mrb[0].mxu0
    %v1856 = vadd.f32 0.0, %v1855
    %v1857 = vpop.f32.mrb[0].mxu0
    %1858 = vdwg.mxu0
    %v1859 = vadd.f32 %v1760, %v1856
    %v1860 = vmax.f32 %v1859, 0.0
    %v1861 = vld [vmem:[#allocation7 + $0x4c0] sm:$0xff]
    %v1862 = vld [vmem:[#allocation7 + $0x4c8] sm:$0xff]
    %v1863 = vld [vmem:[#allocation7 + $0x4d0] sm:$0xff]
    %v1864 = vld [vmem:[#allocation7 + $0x4d8] sm:$0xff]
    %v1865 = vld [vmem:[#allocation7 + $0x4e0] sm:$0xff]
    %v1866 = vld [vmem:[#allocation7 + $0x4e8] sm:$0xff]
    %v1867 = vld [vmem:[#allocation7 + $0x4f0] sm:$0xff]
    %v1868 = vld [vmem:[#allocation7 + $0x4f8] sm:$0xff]
    %v1869 = vld [vmem:[#allocation7 + $0x500] sm:$0xff]
    %v1870 = vld [vmem:[#allocation7 + $0x508] sm:$0xff]
    %v1871 = vld [vmem:[#allocation7 + $0x510] sm:$0xff]
    %v1872 = vld [vmem:[#allocation7 + $0x518] sm:$0xff]
    %v1873 = vld [vmem:[#allocation7 + $0x520] sm:$0xff]
    %v1874 = vld [vmem:[#allocation7 + $0x528] sm:$0xff]
    %v1875 = vld [vmem:[#allocation7 + $0x530] sm:$0xff]
    %v1876 = vld [vmem:[#allocation7 + $0x538] sm:$0xff]
    %v1877 = vld [vmem:[#allocation7 + $0x543] sm:$0x1]
    %v1878 = vlaneseq
    %v1879 = vshrl.u32 %v1878, 7
    %v1880 = vsub.s32 0, %v1879
    %v1881 = vrot.slane %v1877, %v1880
    %1882 = vmatprep.subr.mxu0 0.0
    %1883 = vmatpush1.msra.mxu0 %v1861
    %1884 = vmatprep.subr.mxu0 0.0
    %1885 = vmatpush1.msra.mxu0 %v1862
    %1886 = vmatprep.subr.mxu0 0.0
    %1887 = vmatpush1.msra.mxu0 %v1863
    %1888 = vmatprep.subr.mxu0 0.0
    %1889 = vmatpush1.msra.mxu0 %v1864
    %1890 = vmatprep.subr.mxu0 0.0
    %1891 = vmatpush1.msra.mxu0 %v1865
    %1892 = vmatprep.subr.mxu0 0.0
    %1893 = vmatpush1.msra.mxu0 %v1866
    %1894 = vmatprep.subr.mxu0 0.0
    %1895 = vmatpush1.msra.mxu0 %v1867
    %1896 = vmatprep.subr.mxu0 0.0
    %1897 = vmatpush1.msra.mxu0 %v1868
    %1898 = vmatprep.subr.mxu0 0.0
    %1899 = vmatpush1.msra.mxu0 %v1869
    %1900 = vmatprep.subr.mxu0 0.0
    %1901 = vmatpush1.msra.mxu0 %v1870
    %1902 = vmatprep.subr.mxu0 0.0
    %1903 = vmatpush1.msra.mxu0 %v1871
    %1904 = vmatprep.subr.mxu0 0.0
    %1905 = vmatpush1.msra.mxu0 %v1872
    %1906 = vmatprep.subr.mxu0 0.0
    %1907 = vmatpush1.msra.mxu0 %v1873
    %1908 = vmatprep.subr.mxu0 0.0
    %1909 = vmatpush1.msra.mxu0 %v1874
    %1910 = vmatprep.subr.mxu0 0.0
    %1911 = vmatpush1.msra.mxu0 %v1875
    %1912 = vmatprep.subr.mxu0 0.0
    %1913 = vmatpush1.msra.mxu0 %v1876
    %1914 = vmatprep.subr.mxu0 0.0
    %1915 = vmatpush1.msra.mxu0 0.0
    %1916 = vmatprep.subr.mxu0 0.0
    %1917 = vmatpush1.msra.mxu0 0.0
    %1918 = vmatprep.subr.mxu0 0.0
    %1919 = vmatpush1.msra.mxu0 0.0
    %1920 = vmatprep.subr.mxu0 0.0
    %1921 = vmatpush1.msra.mxu0 0.0
    %1922 = vmatprep.subr.mxu0 0.0
    %1923 = vmatpush1.msra.mxu0 0.0
    %1924 = vmatprep.subr.mxu0 0.0
    %1925 = vmatpush1.msra.mxu0 0.0
    %1926 = vmatprep.subr.mxu0 0.0
    %1927 = vmatpush1.msra.mxu0 0.0
    %1928 = vmatprep.subr.mxu0 0.0
    %1929 = vmatpush1.msra.mxu0 0.0
    %1930 = vmatprep.subr.mxu0 0.0
    %1931 = vmatpush1.msra.mxu0 0.0
    %1932 = vmatprep.subr.mxu0 0.0
    %1933 = vmatpush1.msra.mxu0 0.0
    %1934 = vmatprep.subr.mxu0 0.0
    %1935 = vmatpush1.msra.mxu0 0.0
    %1936 = vmatprep.subr.mxu0 0.0
    %1937 = vmatpush1.msra.mxu0 0.0
    %1938 = vmatprep.subr.mxu0 0.0
    %1939 = vmatpush1.msra.mxu0 0.0
    %1940 = vmatprep.subr.mxu0 0.0
    %1941 = vmatpush1.msra.mxu0 0.0
    %1942 = vmatprep.subr.mxu0 0.0
    %1943 = vmatpush1.msra.mxu0 0.0
    %1944 = vmatprep.subr.mxu0 0.0
    %1945 = vmatpush1.msra.mxu0 0.0
    %1946 = vmatprep.mubr.f32.mxu0 0.0
    %1947 = vmatmul.mubr.f32.gmra.mrb[0].mxu0 %v1860
    %v1948 = vpop.f32.mrb[0].mxu0
    %v1949 = vadd.f32 %v1881, %v1948
    %v1950 = vpop.f32.mrb[0].mxu0
    %1951 = vdwg.mxu0
    %vm1952 = vcmask 74752
    %1953 = vst.msk [vmem:[#allocation9] sm:$0x3] %vm1952, %v1949
    // Predicated region
    $region18: #{vgg_feats_forward.1} parent=1 // pred_check
      _
    $region19: #{vgg_feats_forward.1} parent=1 // pred_check_branch
      %1955 = sbr.rel (0) target = $region21
    $region20: #{vgg_feats_forward.1} parent=1 // pred_region
      %s1957 = ssub.s32 32, 32
      %1958 = vsyncadd [#allocation6], %s1957
      %s1960 = sshll.u32 [#allocation9], 4
      %s1961 = int_to_ptr.vmem [resolvable:$true] %s1960
      %1963 = dma.vmem_to_hbm [thread:$0]  %s1961, 32, %s2, [#allocation6]
    $region21: #{vgg_feats_forward.1} parent=1 // pred_fallthru
      _
    // Predicated region
    $region22: #{vgg_feats_forward.1} parent=1 // pred_check
      _
    $region23: #{vgg_feats_forward.1} parent=1 // pred_check_branch
      %1965 = sbr.rel (0) target = $region25
    $region24: #{vgg_feats_forward.1} parent=1 // pred_region
      %1966 = dma.done [#allocation6], 32
    $region25: #{vgg_feats_forward.1} parent=1 // pred_fallthru
      _
    %1967 = vsyncpa [#allocation5], 1
    %1968 = vsyncpa [#allocation8], 1
    %1969 = vsyncpa [#allocation6], 1

</llo_original>
